<compile_context>
chip_gen: v7x
topology: tpu7x:2x2x1
jax: 0.10.0
libtpu: 0.0.40
codegen_flags: <defaults>
</compile_context>

<pallas_src>
import functools

import numpy as np
import jax
import jax.numpy as jnp
from jax.experimental import pallas as pl
from jax.experimental.pallas import tpu as pltpu


def _gaa_kernel(batch_ref, x_ref,
                wq_ref, bq_ref, bk_ref, bv_ref,
                wo_ref, bo_ref,
                vt_out_ref,
                *, max_nodes):
    """Single grid step handling all B graphs at once.

    1. scatter_mean(x, batch) for every graph: one-hot mask (B,N) @ x (N,H) -> (B,H).
    2. T sequential single-head attention steps.  Because x_batched is all zeros in
       the reference module, keys/values are exactly the bias rows bk / bv, so the
       key/value projections are dropped; the query projection and the softmax over
       M identical scores are kept (bit-exact with the full path).
    3. The T rows are staged locally and written with one lane-dense (B, T*H) store.
    """
    N, H = x_ref.shape
    B = vt_out_ref.shape[0]
    T = vt_out_ref.shape[-1] // H
    M = max_nodes
    scale = 1.0 / float(np.sqrt(H))

    # --- segment mean over nodes: mask(B,N) @ x(N,H) -> (B,H) ------------------
    x = x_ref[...]                                                       # (N, H)
    seg_ids = jax.lax.broadcasted_iota(jnp.int32, (B, N), 0)             # (B, N)
    maskf = (seg_ids == batch_ref[...]).astype(jnp.float32)              # (B, N)
    cnt = jnp.sum(maskf, axis=-1, keepdims=True)                         # (B, 1)
    inv_cnt = pl.reciprocal(jnp.maximum(cnt, 1.0), approx=False)         # guard empty graphs
    agg = jnp.dot(maskf, x, preferred_element_type=jnp.float32) * inv_cnt  # (B, H)

    # --- keys / values: x_batched == 0  =>  k == bk, v == bv (exact) -----------
    bk = bk_ref[...]                                                     # (1, H)
    vp = jnp.broadcast_to(bv_ref[...], (M, H))                           # (M, H) value rows

    rows = []
    psum = jnp.zeros((B, H), jnp.float32)   # running sum of already-emitted token rows
    for i in range(T):                       # T is a small static hyper-parameter -> unrolled
        qp = jnp.dot(agg, wq_ref[...], preferred_element_type=jnp.float32) + bq_ref[...]
        # every key slot holds the same vector bk -> all M scores are identical
        s1 = jnp.sum(qp * bk, axis=-1, keepdims=True) * scale            # (B, 1)
        s = jnp.broadcast_to(s1, (B, M))                                 # (B, M)
        e = jnp.exp(s - jnp.max(s, axis=-1, keepdims=True))              # == 1 exactly
        attn = e * pl.reciprocal(jnp.sum(e, axis=-1, keepdims=True), approx=False)
        ctx = jnp.dot(attn, vp, preferred_element_type=jnp.float32)      # (B, H)
        out = jnp.dot(ctx, wo_ref[...], preferred_element_type=jnp.float32) + bo_ref[...]
        # mean of cat(virtual_tokens[:, :i], out) along the token axis:
        agg = (psum + out) / float(i + 1)
        psum = psum + agg
        rows.append(agg)

    # single lane-dense store: (B, T*H); with T=4, H=32 this is exactly 128 lanes
    vt_out_ref[...] = jnp.concatenate(rows, axis=-1)


def graph_attention_aggregator(x, batch_ids, params, num_virtual_tokens, batch_size, max_nodes):
    N, H = x.shape
    B, T, M = batch_size, num_virtual_tokens, max_nodes
    batch_2d = batch_ids.astype(jnp.int32).reshape(1, N)

    kernel = functools.partial(_gaa_kernel, max_nodes=M)
    full = lambda r, c: pl.BlockSpec((r, c), lambda i: (0, 0))
    grid_spec = pltpu.PrefetchScalarGridSpec(
        num_scalar_prefetch=0,
        # All B graphs in one step (weights/x DMA'd once, batched (B,H) matmuls).
        # If B grows on v7x, split this axis into B-chunks and mark it "parallel".
        grid=(1,),
        in_specs=[
            full(1, N),                      # batch ids
            full(N, H),                      # node features
            full(H, H), full(1, H),          # Wq^T, bq
            full(1, H), full(1, H),          # bk, bv   (Wk/Wv unused: x_batched == 0)
            full(H, H), full(1, H),          # Wo^T, bo
        ],
        out_specs=pl.BlockSpec((B, T * H), lambda i: (0, 0)),
    )
    vt_flat = pl.pallas_call(
        kernel,
        out_shape=jax.ShapeDtypeStruct((B, T * H), jnp.float32),
        grid_spec=grid_spec,
        compiler_params=pltpu.CompilerParams(dimension_semantics=("arbitrary",)),
    )(batch_2d, x,
      params["wq_t"], params["bq"], params["bk"], params["bv"],
      params["wo_t"], params["bo"])
    return vt_flat.reshape(B, T, H)


def _reference(x, batch_ids, params, T, B, M):
    """Pure-JAX mirror of the PyTorch forward (full x_batched path, for checking)."""
    N, H = x.shape
    seg_sum = jax.ops.segment_sum(x, batch_ids, num_segments=B)
    cnt = jax.ops.segment_sum(jnp.ones((N,), jnp.float32), batch_ids, num_segments=B)
    agg = (seg_sum / jnp.maximum(cnt, 1.0)[:, None])[:, None, :]          # (B, 1, H)
    xb = jnp.zeros((B, M, H), jnp.float32)                                # never populated
    k = xb @ params["wk_t"] + params["bk"]
    v = xb @ params["wv_t"] + params["bv"]
    vt = jnp.zeros((B, T, H), jnp.float32)
    for i in range(T):
        q = agg @ params["wq_t"] + params["bq"]
        s = jnp.einsum("bqh,bkh->bqk", q, k) / jnp.sqrt(float(H))
        a = jax.nn.softmax(s, axis=-1)
        ctx = jnp.einsum("bqk,bkh->bqh", a, v)
        out = ctx @ params["wo_t"] + params["bo"]
        agg = (jnp.sum(vt[:, :i, :], axis=1, keepdims=True) + out) / float(i + 1)
        vt = vt.at[:, i, :].set(agg[:, 0, :])
    return vt


if __name__ == "__main__":
    # hidden_channels=32, num_virtual_tokens=4, num_attention_heads=1 (default)
    H, T = 32, 4
    np_batch = np.array([0] * 10 + [1] * 6, dtype=np.int32)   # 2 graphs, 16 nodes total
    N = int(np_batch.shape[0])
    B = int(np_batch.max()) + 1
    M = int(np.bincount(np_batch).max())                      # max(batch.bincount())

    key = jax.random.PRNGKey(0)
    ks = jax.random.split(key, 6)
    x = jax.random.normal(ks[0], (N, H), jnp.float32)
    in_proj_w = 0.1 * jax.random.normal(ks[1], (3 * H, H), jnp.float32)   # MHA in_proj_weight
    in_proj_b = 0.1 * jax.random.normal(ks[2], (3 * H,), jnp.float32)     # MHA in_proj_bias
    out_proj_w = 0.1 * jax.random.normal(ks[3], (H, H), jnp.float32)      # MHA out_proj.weight
    out_proj_b = 0.1 * jax.random.normal(ks[4], (H,), jnp.float32)        # MHA out_proj.bias
    # self.virtual_tokens: every row is overwritten inside the loop before being read,
    # so the random init never influences the returned tokens; kept for __init__ parity.
    _vt_init = jax.random.normal(ks[5], (T, H), jnp.float32)

    params = dict(
        wq_t=in_proj_w[0:H].T,
        wk_t=in_proj_w[H:2 * H].T,
        wv_t=in_proj_w[2 * H:3 * H].T,
        bq=in_proj_b[0:H].reshape(1, H),
        bk=in_proj_b[H:2 * H].reshape(1, H),
        bv=in_proj_b[2 * H:3 * H].reshape(1, H),
        wo_t=out_proj_w.T,
        bo=out_proj_b.reshape(1, H),
    )

    batch_ids = jnp.asarray(np_batch)
    vt = graph_attention_aggregator(x, batch_ids, params, T, B, M)
    vt = jax.block_until_ready(vt)

    ref = _reference(x, batch_ids, params, T, B, M)
    np.testing.assert_allclose(np.asarray(vt), np.asarray(ref), rtol=1e-5, atol=1e-5)
    print("KERNEL_OK")
</pallas_src>

<mosaic_0001>
module attributes {stable_mosaic.version = 11 : i64} {
  func.func @_gaa_kernel(%arg0: i32, %arg1: memref<1x16xi32, #tpu.memory_space<vmem>>, %arg2: memref<16x32xf32, #tpu.memory_space<vmem>>, %arg3: memref<32x32xf32, #tpu.memory_space<vmem>>, %arg4: memref<1x32xf32, #tpu.memory_space<vmem>>, %arg5: memref<1x32xf32, #tpu.memory_space<vmem>>, %arg6: memref<1x32xf32, #tpu.memory_space<vmem>>, %arg7: memref<32x32xf32, #tpu.memory_space<vmem>>, %arg8: memref<1x32xf32, #tpu.memory_space<vmem>>, %arg9: memref<2x128xf32, #tpu.memory_space<vmem>>) attributes {dimension_semantics = [#tpu.dimension_semantics<arbitrary>], iteration_bounds = array<i64: 1>, scalar_prefetch = 0 : i64, scratch_operands = 0 : i64, tpu.core_type = #tpu.core_type<tc>, window_params = [{pipeline_mode = #tpu.pipeline_mode<synchronous>, transform_indices = @transform_0, window_bounds = array<i64: 1, 16>}, {pipeline_mode = #tpu.pipeline_mode<synchronous>, transform_indices = @transform_1, window_bounds = array<i64: 16, 32>}, {pipeline_mode = #tpu.pipeline_mode<synchronous>, transform_indices = @transform_2, window_bounds = array<i64: 32, 32>}, {pipeline_mode = #tpu.pipeline_mode<synchronous>, transform_indices = @transform_3, window_bounds = array<i64: 1, 32>}, {pipeline_mode = #tpu.pipeline_mode<synchronous>, transform_indices = @transform_4, window_bounds = array<i64: 1, 32>}, {pipeline_mode = #tpu.pipeline_mode<synchronous>, transform_indices = @transform_5, window_bounds = array<i64: 1, 32>}, {pipeline_mode = #tpu.pipeline_mode<synchronous>, transform_indices = @transform_6, window_bounds = array<i64: 32, 32>}, {pipeline_mode = #tpu.pipeline_mode<synchronous>, transform_indices = @transform_7, window_bounds = array<i64: 1, 32>}, {pipeline_mode = #tpu.pipeline_mode<synchronous>, transform_indices = @transform_8, window_bounds = array<i64: 2, 128>}]} {
    %c0 = arith.constant 0 : index
    %c0_0 = arith.constant 0 : index
    %0 = vector.load %arg2[%c0, %c0_0] : memref<16x32xf32, #tpu.memory_space<vmem>>, vector<16x32xf32>
    %1 = tpu.iota {dimensions = array<i32: 0>} : vector<2x16xi32>
    %c0_1 = arith.constant 0 : index
    %c0_2 = arith.constant 0 : index
    %2 = vector.load %arg1[%c0_1, %c0_2] : memref<1x16xi32, #tpu.memory_space<vmem>>, vector<1x16xi32>
    %3 = vector.broadcast %2 : vector<1x16xi32> to vector<2x16xi32>
    %4 = arith.cmpi eq, %1, %3 : vector<2x16xi32>
    %5 = arith.extui %4 : vector<2x16xi1> to vector<2x16xi32>
    %6 = arith.sitofp %5 : vector<2x16xi32> to vector<2x16xf32>
    %cst = arith.constant dense<0.000000e+00> : vector<2xf32>
    %7 = vector.multi_reduction <add>, %6, %cst [1] : vector<2x16xf32> to vector<2xf32>
    %8 = vector.shape_cast %7 : vector<2xf32> to vector<2x1xf32>
    %cst_3 = arith.constant 1.000000e+00 : f32
    %9 = vector.broadcast %cst_3 : f32 to vector<2x1xf32>
    %10 = arith.maximumf %8, %9 : vector<2x1xf32>
    %11 = tpu.reciprocal %10 : vector<2x1xf32> -> vector<2x1xf32>
    %cst_4 = arith.constant dense<0.000000e+00> : vector<2x32xf32>
    %12 = tpu.matmul %6, %0, %cst_4 {dimension_numbers = #tpu.dot_dimension_numbers<[1], [0], [0], [1], [0, 0, 1, 1], [], []>} : vector<2x16xf32>, vector<16x32xf32>, vector<2x32xf32> -> vector<2x32xf32>
    %13 = vector.broadcast %11 : vector<2x1xf32> to vector<2x32xf32>
    %14 = arith.mulf %12, %13 : vector<2x32xf32>
    %c0_5 = arith.constant 0 : index
    %c0_6 = arith.constant 0 : index
    %15 = vector.load %arg5[%c0_5, %c0_6] : memref<1x32xf32, #tpu.memory_space<vmem>>, vector<1x32xf32>
    %c0_7 = arith.constant 0 : index
    %c0_8 = arith.constant 0 : index
    %16 = vector.load %arg6[%c0_7, %c0_8] : memref<1x32xf32, #tpu.memory_space<vmem>>, vector<1x32xf32>
    %17 = vector.shape_cast %16 : vector<1x32xf32> to vector<1x32xf32>
    %18 = vector.broadcast %17 : vector<1x32xf32> to vector<10x32xf32>
    %cst_9 = arith.constant 0.000000e+00 : f32
    %19 = vector.broadcast %cst_9 : f32 to vector<2x32xf32>
    %c0_10 = arith.constant 0 : index
    %c0_11 = arith.constant 0 : index
    %20 = vector.load %arg3[%c0_10, %c0_11] : memref<32x32xf32, #tpu.memory_space<vmem>>, vector<32x32xf32>
    %cst_12 = arith.constant dense<0.000000e+00> : vector<2x32xf32>
    %21 = tpu.matmul %14, %20, %cst_12 {dimension_numbers = #tpu.dot_dimension_numbers<[1], [0], [0], [1], [0, 0, 1, 1], [], []>} : vector<2x32xf32>, vector<32x32xf32>, vector<2x32xf32> -> vector<2x32xf32>
    %c0_13 = arith.constant 0 : index
    %c0_14 = arith.constant 0 : index
    %22 = vector.load %arg4[%c0_13, %c0_14] : memref<1x32xf32, #tpu.memory_space<vmem>>, vector<1x32xf32>
    %23 = vector.broadcast %22 : vector<1x32xf32> to vector<2x32xf32>
    %24 = arith.addf %21, %23 : vector<2x32xf32>
    %25 = vector.broadcast %15 : vector<1x32xf32> to vector<2x32xf32>
    %26 = arith.mulf %24, %25 : vector<2x32xf32>
    %cst_15 = arith.constant dense<0.000000e+00> : vector<2xf32>
    %27 = vector.multi_reduction <add>, %26, %cst_15 [1] : vector<2x32xf32> to vector<2xf32>
    %28 = vector.shape_cast %27 : vector<2xf32> to vector<2x1xf32>
    %cst_16 = arith.constant 0.176776692 : f32
    %29 = vector.broadcast %cst_16 : f32 to vector<2x1xf32>
    %30 = arith.mulf %28, %29 : vector<2x1xf32>
    %31 = vector.shape_cast %30 : vector<2x1xf32> to vector<2x1xf32>
    %32 = vector.broadcast %31 : vector<2x1xf32> to vector<2x10xf32>
    %cst_17 = arith.constant dense<0xFF800000> : vector<2xf32>
    %33 = vector.multi_reduction <maximumf>, %32, %cst_17 [1] : vector<2x10xf32> to vector<2xf32>
    %34 = vector.shape_cast %33 : vector<2xf32> to vector<2x1xf32>
    %35 = vector.broadcast %34 : vector<2x1xf32> to vector<2x10xf32>
    %36 = arith.subf %32, %35 : vector<2x10xf32>
    %37 = math.exp %36 : vector<2x10xf32>
    %cst_18 = arith.constant dense<0.000000e+00> : vector<2xf32>
    %38 = vector.multi_reduction <add>, %37, %cst_18 [1] : vector<2x10xf32> to vector<2xf32>
    %39 = vector.shape_cast %38 : vector<2xf32> to vector<2x1xf32>
    %40 = tpu.reciprocal %39 : vector<2x1xf32> -> vector<2x1xf32>
    %41 = vector.broadcast %40 : vector<2x1xf32> to vector<2x10xf32>
    %42 = arith.mulf %37, %41 : vector<2x10xf32>
    %cst_19 = arith.constant dense<0.000000e+00> : vector<2x32xf32>
    %43 = tpu.matmul %42, %18, %cst_19 {dimension_numbers = #tpu.dot_dimension_numbers<[1], [0], [0], [1], [0, 0, 1, 1], [], []>} : vector<2x10xf32>, vector<10x32xf32>, vector<2x32xf32> -> vector<2x32xf32>
    %c0_20 = arith.constant 0 : index
    %c0_21 = arith.constant 0 : index
    %44 = vector.load %arg7[%c0_20, %c0_21] : memref<32x32xf32, #tpu.memory_space<vmem>>, vector<32x32xf32>
    %cst_22 = arith.constant dense<0.000000e+00> : vector<2x32xf32>
    %45 = tpu.matmul %43, %44, %cst_22 {dimension_numbers = #tpu.dot_dimension_numbers<[1], [0], [0], [1], [0, 0, 1, 1], [], []>} : vector<2x32xf32>, vector<32x32xf32>, vector<2x32xf32> -> vector<2x32xf32>
    %c0_23 = arith.constant 0 : index
    %c0_24 = arith.constant 0 : index
    %46 = vector.load %arg8[%c0_23, %c0_24] : memref<1x32xf32, #tpu.memory_space<vmem>>, vector<1x32xf32>
    %47 = vector.broadcast %46 : vector<1x32xf32> to vector<2x32xf32>
    %48 = arith.addf %45, %47 : vector<2x32xf32>
    %49 = arith.addf %19, %48 : vector<2x32xf32>
    %cst_25 = arith.constant 1.000000e+00 : f32
    %50 = vector.broadcast %cst_25 : f32 to vector<2x32xf32>
    %51 = arith.divf %49, %50 : vector<2x32xf32>
    %52 = arith.addf %19, %51 : vector<2x32xf32>
    %c0_26 = arith.constant 0 : index
    %c0_27 = arith.constant 0 : index
    %53 = vector.load %arg3[%c0_26, %c0_27] : memref<32x32xf32, #tpu.memory_space<vmem>>, vector<32x32xf32>
    %cst_28 = arith.constant dense<0.000000e+00> : vector<2x32xf32>
    %54 = tpu.matmul %51, %53, %cst_28 {dimension_numbers = #tpu.dot_dimension_numbers<[1], [0], [0], [1], [0, 0, 1, 1], [], []>} : vector<2x32xf32>, vector<32x32xf32>, vector<2x32xf32> -> vector<2x32xf32>
    %c0_29 = arith.constant 0 : index
    %c0_30 = arith.constant 0 : index
    %55 = vector.load %arg4[%c0_29, %c0_30] : memref<1x32xf32, #tpu.memory_space<vmem>>, vector<1x32xf32>
    %56 = vector.broadcast %55 : vector<1x32xf32> to vector<2x32xf32>
    %57 = arith.addf %54, %56 : vector<2x32xf32>
    %58 = vector.broadcast %15 : vector<1x32xf32> to vector<2x32xf32>
    %59 = arith.mulf %57, %58 : vector<2x32xf32>
    %cst_31 = arith.constant dense<0.000000e+00> : vector<2xf32>
    %60 = vector.multi_reduction <add>, %59, %cst_31 [1] : vector<2x32xf32> to vector<2xf32>
    %61 = vector.shape_cast %60 : vector<2xf32> to vector<2x1xf32>
    %cst_32 = arith.constant 0.176776692 : f32
    %62 = vector.broadcast %cst_32 : f32 to vector<2x1xf32>
    %63 = arith.mulf %61, %62 : vector<2x1xf32>
    %64 = vector.shape_cast %63 : vector<2x1xf32> to vector<2x1xf32>
    %65 = vector.broadcast %64 : vector<2x1xf32> to vector<2x10xf32>
    %cst_33 = arith.constant dense<0xFF800000> : vector<2xf32>
    %66 = vector.multi_reduction <maximumf>, %65, %cst_33 [1] : vector<2x10xf32> to vector<2xf32>
    %67 = vector.shape_cast %66 : vector<2xf32> to vector<2x1xf32>
    %68 = vector.broadcast %67 : vector<2x1xf32> to vector<2x10xf32>
    %69 = arith.subf %65, %68 : vector<2x10xf32>
    %70 = math.exp %69 : vector<2x10xf32>
    %cst_34 = arith.constant dense<0.000000e+00> : vector<2xf32>
    %71 = vector.multi_reduction <add>, %70, %cst_34 [1] : vector<2x10xf32> to vector<2xf32>
    %72 = vector.shape_cast %71 : vector<2xf32> to vector<2x1xf32>
    %73 = tpu.reciprocal %72 : vector<2x1xf32> -> vector<2x1xf32>
    %74 = vector.broadcast %73 : vector<2x1xf32> to vector<2x10xf32>
    %75 = arith.mulf %70, %74 : vector<2x10xf32>
    %cst_35 = arith.constant dense<0.000000e+00> : vector<2x32xf32>
    %76 = tpu.matmul %75, %18, %cst_35 {dimension_numbers = #tpu.dot_dimension_numbers<[1], [0], [0], [1], [0, 0, 1, 1], [], []>} : vector<2x10xf32>, vector<10x32xf32>, vector<2x32xf32> -> vector<2x32xf32>
    %c0_36 = arith.constant 0 : index
    %c0_37 = arith.constant 0 : index
    %77 = vector.load %arg7[%c0_36, %c0_37] : memref<32x32xf32, #tpu.memory_space<vmem>>, vector<32x32xf32>
    %cst_38 = arith.constant dense<0.000000e+00> : vector<2x32xf32>
    %78 = tpu.matmul %76, %77, %cst_38 {dimension_numbers = #tpu.dot_dimension_numbers<[1], [0], [0], [1], [0, 0, 1, 1], [], []>} : vector<2x32xf32>, vector<32x32xf32>, vector<2x32xf32> -> vector<2x32xf32>
    %c0_39 = arith.constant 0 : index
    %c0_40 = arith.constant 0 : index
    %79 = vector.load %arg8[%c0_39, %c0_40] : memref<1x32xf32, #tpu.memory_space<vmem>>, vector<1x32xf32>
    %80 = vector.broadcast %79 : vector<1x32xf32> to vector<2x32xf32>
    %81 = arith.addf %78, %80 : vector<2x32xf32>
    %82 = arith.addf %52, %81 : vector<2x32xf32>
    %cst_41 = arith.constant 2.000000e+00 : f32
    %83 = vector.broadcast %cst_41 : f32 to vector<2x32xf32>
    %84 = arith.divf %82, %83 : vector<2x32xf32>
    %85 = arith.addf %52, %84 : vector<2x32xf32>
    %c0_42 = arith.constant 0 : index
    %c0_43 = arith.constant 0 : index
    %86 = vector.load %arg3[%c0_42, %c0_43] : memref<32x32xf32, #tpu.memory_space<vmem>>, vector<32x32xf32>
    %cst_44 = arith.constant dense<0.000000e+00> : vector<2x32xf32>
    %87 = tpu.matmul %84, %86, %cst_44 {dimension_numbers = #tpu.dot_dimension_numbers<[1], [0], [0], [1], [0, 0, 1, 1], [], []>} : vector<2x32xf32>, vector<32x32xf32>, vector<2x32xf32> -> vector<2x32xf32>
    %c0_45 = arith.constant 0 : index
    %c0_46 = arith.constant 0 : index
    %88 = vector.load %arg4[%c0_45, %c0_46] : memref<1x32xf32, #tpu.memory_space<vmem>>, vector<1x32xf32>
    %89 = vector.broadcast %88 : vector<1x32xf32> to vector<2x32xf32>
    %90 = arith.addf %87, %89 : vector<2x32xf32>
    %91 = vector.broadcast %15 : vector<1x32xf32> to vector<2x32xf32>
    %92 = arith.mulf %90, %91 : vector<2x32xf32>
    %cst_47 = arith.constant dense<0.000000e+00> : vector<2xf32>
    %93 = vector.multi_reduction <add>, %92, %cst_47 [1] : vector<2x32xf32> to vector<2xf32>
    %94 = vector.shape_cast %93 : vector<2xf32> to vector<2x1xf32>
    %cst_48 = arith.constant 0.176776692 : f32
    %95 = vector.broadcast %cst_48 : f32 to vector<2x1xf32>
    %96 = arith.mulf %94, %95 : vector<2x1xf32>
    %97 = vector.shape_cast %96 : vector<2x1xf32> to vector<2x1xf32>
    %98 = vector.broadcast %97 : vector<2x1xf32> to vector<2x10xf32>
    %cst_49 = arith.constant dense<0xFF800000> : vector<2xf32>
    %99 = vector.multi_reduction <maximumf>, %98, %cst_49 [1] : vector<2x10xf32> to vector<2xf32>
    %100 = vector.shape_cast %99 : vector<2xf32> to vector<2x1xf32>
    %101 = vector.broadcast %100 : vector<2x1xf32> to vector<2x10xf32>
    %102 = arith.subf %98, %101 : vector<2x10xf32>
    %103 = math.exp %102 : vector<2x10xf32>
    %cst_50 = arith.constant dense<0.000000e+00> : vector<2xf32>
    %104 = vector.multi_reduction <add>, %103, %cst_50 [1] : vector<2x10xf32> to vector<2xf32>
    %105 = vector.shape_cast %104 : vector<2xf32> to vector<2x1xf32>
    %106 = tpu.reciprocal %105 : vector<2x1xf32> -> vector<2x1xf32>
    %107 = vector.broadcast %106 : vector<2x1xf32> to vector<2x10xf32>
    %108 = arith.mulf %103, %107 : vector<2x10xf32>
    %cst_51 = arith.constant dense<0.000000e+00> : vector<2x32xf32>
    %109 = tpu.matmul %108, %18, %cst_51 {dimension_numbers = #tpu.dot_dimension_numbers<[1], [0], [0], [1], [0, 0, 1, 1], [], []>} : vector<2x10xf32>, vector<10x32xf32>, vector<2x32xf32> -> vector<2x32xf32>
    %c0_52 = arith.constant 0 : index
    %c0_53 = arith.constant 0 : index
    %110 = vector.load %arg7[%c0_52, %c0_53] : memref<32x32xf32, #tpu.memory_space<vmem>>, vector<32x32xf32>
    %cst_54 = arith.constant dense<0.000000e+00> : vector<2x32xf32>
    %111 = tpu.matmul %109, %110, %cst_54 {dimension_numbers = #tpu.dot_dimension_numbers<[1], [0], [0], [1], [0, 0, 1, 1], [], []>} : vector<2x32xf32>, vector<32x32xf32>, vector<2x32xf32> -> vector<2x32xf32>
    %c0_55 = arith.constant 0 : index
    %c0_56 = arith.constant 0 : index
    %112 = vector.load %arg8[%c0_55, %c0_56] : memref<1x32xf32, #tpu.memory_space<vmem>>, vector<1x32xf32>
    %113 = vector.broadcast %112 : vector<1x32xf32> to vector<2x32xf32>
    %114 = arith.addf %111, %113 : vector<2x32xf32>
    %115 = arith.addf %85, %114 : vector<2x32xf32>
    %cst_57 = arith.constant 3.000000e+00 : f32
    %116 = vector.broadcast %cst_57 : f32 to vector<2x32xf32>
    %117 = arith.divf %115, %116 : vector<2x32xf32>
    %118 = arith.addf %85, %117 : vector<2x32xf32>
    %c0_58 = arith.constant 0 : index
    %c0_59 = arith.constant 0 : index
    %119 = vector.load %arg3[%c0_58, %c0_59] : memref<32x32xf32, #tpu.memory_space<vmem>>, vector<32x32xf32>
    %cst_60 = arith.constant dense<0.000000e+00> : vector<2x32xf32>
    %120 = tpu.matmul %117, %119, %cst_60 {dimension_numbers = #tpu.dot_dimension_numbers<[1], [0], [0], [1], [0, 0, 1, 1], [], []>} : vector<2x32xf32>, vector<32x32xf32>, vector<2x32xf32> -> vector<2x32xf32>
    %c0_61 = arith.constant 0 : index
    %c0_62 = arith.constant 0 : index
    %121 = vector.load %arg4[%c0_61, %c0_62] : memref<1x32xf32, #tpu.memory_space<vmem>>, vector<1x32xf32>
    %122 = vector.broadcast %121 : vector<1x32xf32> to vector<2x32xf32>
    %123 = arith.addf %120, %122 : vector<2x32xf32>
    %124 = vector.broadcast %15 : vector<1x32xf32> to vector<2x32xf32>
    %125 = arith.mulf %123, %124 : vector<2x32xf32>
    %cst_63 = arith.constant dense<0.000000e+00> : vector<2xf32>
    %126 = vector.multi_reduction <add>, %125, %cst_63 [1] : vector<2x32xf32> to vector<2xf32>
    %127 = vector.shape_cast %126 : vector<2xf32> to vector<2x1xf32>
    %cst_64 = arith.constant 0.176776692 : f32
    %128 = vector.broadcast %cst_64 : f32 to vector<2x1xf32>
    %129 = arith.mulf %127, %128 : vector<2x1xf32>
    %130 = vector.shape_cast %129 : vector<2x1xf32> to vector<2x1xf32>
    %131 = vector.broadcast %130 : vector<2x1xf32> to vector<2x10xf32>
    %cst_65 = arith.constant dense<0xFF800000> : vector<2xf32>
    %132 = vector.multi_reduction <maximumf>, %131, %cst_65 [1] : vector<2x10xf32> to vector<2xf32>
    %133 = vector.shape_cast %132 : vector<2xf32> to vector<2x1xf32>
    %134 = vector.broadcast %133 : vector<2x1xf32> to vector<2x10xf32>
    %135 = arith.subf %131, %134 : vector<2x10xf32>
    %136 = math.exp %135 : vector<2x10xf32>
    %cst_66 = arith.constant dense<0.000000e+00> : vector<2xf32>
    %137 = vector.multi_reduction <add>, %136, %cst_66 [1] : vector<2x10xf32> to vector<2xf32>
    %138 = vector.shape_cast %137 : vector<2xf32> to vector<2x1xf32>
    %139 = tpu.reciprocal %138 : vector<2x1xf32> -> vector<2x1xf32>
    %140 = vector.broadcast %139 : vector<2x1xf32> to vector<2x10xf32>
    %141 = arith.mulf %136, %140 : vector<2x10xf32>
    %cst_67 = arith.constant dense<0.000000e+00> : vector<2x32xf32>
    %142 = tpu.matmul %141, %18, %cst_67 {dimension_numbers = #tpu.dot_dimension_numbers<[1], [0], [0], [1], [0, 0, 1, 1], [], []>} : vector<2x10xf32>, vector<10x32xf32>, vector<2x32xf32> -> vector<2x32xf32>
    %c0_68 = arith.constant 0 : index
    %c0_69 = arith.constant 0 : index
    %143 = vector.load %arg7[%c0_68, %c0_69] : memref<32x32xf32, #tpu.memory_space<vmem>>, vector<32x32xf32>
    %cst_70 = arith.constant dense<0.000000e+00> : vector<2x32xf32>
    %144 = tpu.matmul %142, %143, %cst_70 {dimension_numbers = #tpu.dot_dimension_numbers<[1], [0], [0], [1], [0, 0, 1, 1], [], []>} : vector<2x32xf32>, vector<32x32xf32>, vector<2x32xf32> -> vector<2x32xf32>
    %c0_71 = arith.constant 0 : index
    %c0_72 = arith.constant 0 : index
    %145 = vector.load %arg8[%c0_71, %c0_72] : memref<1x32xf32, #tpu.memory_space<vmem>>, vector<1x32xf32>
    %146 = vector.broadcast %145 : vector<1x32xf32> to vector<2x32xf32>
    %147 = arith.addf %144, %146 : vector<2x32xf32>
    %148 = arith.addf %118, %147 : vector<2x32xf32>
    %cst_73 = arith.constant 4.000000e+00 : f32
    %149 = vector.broadcast %cst_73 : f32 to vector<2x32xf32>
    %150 = arith.divf %148, %149 : vector<2x32xf32>
    %151 = tpu.concatenate %51, %84, %117, %150 in 1 : vector<2x32xf32>, vector<2x32xf32>, vector<2x32xf32>, vector<2x32xf32> -> vector<2x128xf32>
    %c0_74 = arith.constant 0 : index
    %c0_75 = arith.constant 0 : index
    %152 = vector.load %arg9[%c0_74, %c0_75] : memref<2x128xf32, #tpu.memory_space<vmem>>, vector<2x128xf32>
    tpu.vector_store %arg9[%c0_74, %c0_75], %151 {strides = array<i32>} : memref<2x128xf32, #tpu.memory_space<vmem>>, vector<2x128xf32>,
    return
  }
  func.func @transform_0(%arg0: i32) -> (i32, i32) {
    %c0_i32 = arith.constant 0 : i32
    %c0_i32_0 = arith.constant 0 : i32
    %c0_i32_1 = arith.constant 0 : i32
    return %c0_i32, %c0_i32_0 : i32, i32
  }
  func.func @transform_1(%arg0: i32) -> (i32, i32) {
    %c0_i32 = arith.constant 0 : i32
    %c0_i32_0 = arith.constant 0 : i32
    %c0_i32_1 = arith.constant 0 : i32
    return %c0_i32, %c0_i32_0 : i32, i32
  }
  func.func @transform_2(%arg0: i32) -> (i32, i32) {
    %c0_i32 = arith.constant 0 : i32
    %c0_i32_0 = arith.constant 0 : i32
    %c0_i32_1 = arith.constant 0 : i32
    return %c0_i32, %c0_i32_0 : i32, i32
  }
  func.func @transform_3(%arg0: i32) -> (i32, i32) {
    %c0_i32 = arith.constant 0 : i32
    %c0_i32_0 = arith.constant 0 : i32
    %c0_i32_1 = arith.constant 0 : i32
    return %c0_i32, %c0_i32_0 : i32, i32
  }
  func.func @transform_4(%arg0: i32) -> (i32, i32) {
    %c0_i32 = arith.constant 0 : i32
    %c0_i32_0 = arith.constant 0 : i32
    %c0_i32_1 = arith.constant 0 : i32
    return %c0_i32, %c0_i32_0 : i32, i32
  }
  func.func @transform_5(%arg0: i32) -> (i32, i32) {
    %c0_i32 = arith.constant 0 : i32
    %c0_i32_0 = arith.constant 0 : i32
    %c0_i32_1 = arith.constant 0 : i32
    return %c0_i32, %c0_i32_0 : i32, i32
  }
  func.func @transform_6(%arg0: i32) -> (i32, i32) {
    %c0_i32 = arith.constant 0 : i32
    %c0_i32_0 = arith.constant 0 : i32
    %c0_i32_1 = arith.constant 0 : i32
    return %c0_i32, %c0_i32_0 : i32, i32
  }
  func.func @transform_7(%arg0: i32) -> (i32, i32) {
    %c0_i32 = arith.constant 0 : i32
    %c0_i32_0 = arith.constant 0 : i32
    %c0_i32_1 = arith.constant 0 : i32
    return %c0_i32, %c0_i32_0 : i32, i32
  }
  func.func @transform_8(%arg0: i32) -> (i32, i32) {
    %c0_i32 = arith.constant 0 : i32
    %c0_i32_0 = arith.constant 0 : i32
    %c0_i32_1 = arith.constant 0 : i32
    return %c0_i32, %c0_i32_0 : i32, i32
  }
}

</mosaic_0001>

<llo_original>
// kernel: tpu_custom_call.1
$region0: #{tpu_custom_call.1}
  #allocation0 [shape = 'u32[]', space=smem, size = 0x4, offset = 0x4, fixed_abs, tag = 'smem constant byte address 0x4 - core index']
  #allocation1 [shape = 'u32[144,128]{1,0:T(1,128)}', space=vmem, size = 0x12000, scoped, tag = 'internal scratch']
  %s0 = inlined_call_operand.hbm [shape: s32[1,16], index: 0, kind: input, shape index: {}]
  %s1 = inlined_call_operand.hbm [shape: f32[16,32], index: 1, kind: input, shape index: {}]
  %s2 = inlined_call_operand.hbm [shape: f32[32,32], index: 2, kind: input, shape index: {}]
  %s3 = inlined_call_operand.vmem [shape: f32[1,32], index: 3, kind: input, shape index: {}]
  %s4 = inlined_call_operand.vmem [shape: f32[1,32], index: 4, kind: input, shape index: {}]
  %s5 = inlined_call_operand.vmem [shape: f32[1,32], index: 5, kind: input, shape index: {}]
  %s6 = inlined_call_operand.hbm [shape: f32[32,32], index: 6, kind: input, shape index: {}]
  %s7 = inlined_call_operand.vmem [shape: f32[1,32], index: 7, kind: input, shape index: {}]
  %s8 = inlined_call_operand.hbm [shape: f32[2,128], index: 8, kind: output, shape index: {}]
  %s9 = sld [smem:[#allocation0]]
  $region58: #{tpu_custom_call.1} parent=0
    _
  %s11 = ssub.s32 1, %s9
  %s12 = scalar_select 0, %s11, %s9
  $region1: #{tpu_custom_call.1} parent=0
    #allocation2 [shape = 'u8[512]{0}', space=vmem, size = 0x400, scoped, tag = 'input window, operand 0, single buffered']
    #allocation3 [shape = 's32[1]{0}', space=sflag, size = 0x4, scoped, tag = 'scoped memory for tpu_custom_call.1']
    #allocation4 [shape = 's32[1]{0}', space=sflag, size = 0x4, scoped, tag = 'scoped memory for tpu_custom_call.1']
    #allocation5 [shape = 'u8[8192]{0}', space=vmem, size = 0x2000, scoped, tag = 'input window, operand 1, single buffered']
    #allocation6 [shape = 's32[1]{0}', space=sflag, size = 0x4, scoped, tag = 'scoped memory for tpu_custom_call.1']
    #allocation7 [shape = 'u8[16384]{0}', space=vmem, size = 0x4000, scoped, tag = 'input window, operand 2, single buffered']
    #allocation8 [shape = 'u8[16384]{0}', space=vmem, size = 0x4000, scoped, tag = 'input window, operand 6, single buffered']
    #allocation9 [shape = 's32[1]{0}', space=sflag, size = 0x4, scoped, tag = 'scoped memory for tpu_custom_call.1']
    #allocation10 [shape = 'u8[1024]{0}', space=vmem, size = 0x400, scoped, tag = 'output window, operand 0, single buffered']
    %13 = vsyncpa [#allocation3], 0
    %14 = vsyncpa [#allocation6], 0
    %15 = vsyncpa [#allocation9], 0
    %16 = vsyncpa [#allocation4], 0
    // Predicated region
    $region2: #{tpu_custom_call.1} parent=1 // pred_check
      _
    $region3: #{tpu_custom_call.1} parent=1 // pred_check_branch
      %18 = sbr.rel (0) target = $region5
    $region4: #{tpu_custom_call.1} parent=1 // pred_region
      %s20 = ssub.s32 16, 16
      %21 = vsyncadd [#allocation3], %s20
      %s23 = sshll.u32 [#allocation2], 4
      %s24 = int_to_ptr.vmem [resolvable:$true] %s23
      %26 = dma.hbm_to_vmem [thread:$0]  %s0, 16, %s24, [#allocation3]
    $region5: #{tpu_custom_call.1} parent=1 // pred_fallthru
      _
    // Predicated region
    $region6: #{tpu_custom_call.1} parent=1 // pred_check
      _
    $region7: #{tpu_custom_call.1} parent=1 // pred_check_branch
      %28 = sbr.rel (0) target = $region9
    $region8: #{tpu_custom_call.1} parent=1 // pred_region
      %s30 = ssub.s32 256, 256
      %31 = vsyncadd [#allocation6], %s30
      %s32 = sshll.u32 [#allocation5], 4
      %s33 = int_to_ptr.vmem [resolvable:$true] %s32
      %38 = dma.hbm_to_vmem [thread:$0]  %s1, 256, %s33, [#allocation6], 128, 128, 8
    $region9: #{tpu_custom_call.1} parent=1 // pred_fallthru
      _
    // Predicated region
    $region10: #{tpu_custom_call.1} parent=1 // pred_check
      _
    $region11: #{tpu_custom_call.1} parent=1 // pred_check_branch
      %40 = sbr.rel (0) target = $region13
    $region12: #{tpu_custom_call.1} parent=1 // pred_region
      %s42 = ssub.s32 512, 512
      %43 = vsyncadd [#allocation6], %s42
      %s44 = sshll.u32 [#allocation7], 4
      %s45 = int_to_ptr.vmem [resolvable:$true] %s44
      %50 = dma.hbm_to_vmem [thread:$0]  %s2, 512, %s45, [#allocation6], 128, 128, 8
    $region13: #{tpu_custom_call.1} parent=1 // pred_fallthru
      _
    // Predicated region
    $region14: #{tpu_custom_call.1} parent=1 // pred_check
      _
    $region15: #{tpu_custom_call.1} parent=1 // pred_check_branch
      %52 = sbr.rel (0) target = $region17
    $region16: #{tpu_custom_call.1} parent=1 // pred_region
      _
    $region17: #{tpu_custom_call.1} parent=1 // pred_fallthru
      _
    // Predicated region
    $region18: #{tpu_custom_call.1} parent=1 // pred_check
      _
    $region19: #{tpu_custom_call.1} parent=1 // pred_check_branch
      %54 = sbr.rel (0) target = $region21
    $region20: #{tpu_custom_call.1} parent=1 // pred_region
      _
    $region21: #{tpu_custom_call.1} parent=1 // pred_fallthru
      _
    // Predicated region
    $region22: #{tpu_custom_call.1} parent=1 // pred_check
      _
    $region23: #{tpu_custom_call.1} parent=1 // pred_check_branch
      %56 = sbr.rel (0) target = $region25
    $region24: #{tpu_custom_call.1} parent=1 // pred_region
      _
    $region25: #{tpu_custom_call.1} parent=1 // pred_fallthru
      _
    // Predicated region
    $region26: #{tpu_custom_call.1} parent=1 // pred_check
      _
    $region27: #{tpu_custom_call.1} parent=1 // pred_check_branch
      %58 = sbr.rel (0) target = $region29
    $region28: #{tpu_custom_call.1} parent=1 // pred_region
      %s60 = ssub.s32 512, 512
      %61 = vsyncadd [#allocation9], %s60
      %s62 = sshll.u32 [#allocation8], 4
      %s63 = int_to_ptr.vmem [resolvable:$true] %s62
      %68 = dma.hbm_to_vmem [thread:$0]  %s6, 512, %s63, [#allocation9], 128, 128, 8
    $region29: #{tpu_custom_call.1} parent=1 // pred_fallthru
      _
    // Predicated region
    $region30: #{tpu_custom_call.1} parent=1 // pred_check
      _
    $region31: #{tpu_custom_call.1} parent=1 // pred_check_branch
      %70 = sbr.rel (0) target = $region33
    $region32: #{tpu_custom_call.1} parent=1 // pred_region
      _
    $region33: #{tpu_custom_call.1} parent=1 // pred_fallthru
      _
    // Predicated region
    $region34: #{tpu_custom_call.1} parent=1 // pred_check
      _
    $region35: #{tpu_custom_call.1} parent=1 // pred_check_branch
      %72 = sbr.rel (0) target = $region37
    $region36: #{tpu_custom_call.1} parent=1 // pred_region
      %73 = dma.done [#allocation3], 16
    $region37: #{tpu_custom_call.1} parent=1 // pred_fallthru
      _
    // Predicated region
    $region38: #{tpu_custom_call.1} parent=1 // pred_check
      _
    $region39: #{tpu_custom_call.1} parent=1 // pred_check_branch
      %75 = sbr.rel (0) target = $region41
    $region40: #{tpu_custom_call.1} parent=1 // pred_region
      %76 = dma.done [#allocation6], 256
    $region41: #{tpu_custom_call.1} parent=1 // pred_fallthru
      _
    // Predicated region
    $region42: #{tpu_custom_call.1} parent=1 // pred_check
      _
    $region43: #{tpu_custom_call.1} parent=1 // pred_check_branch
      %78 = sbr.rel (0) target = $region45
    $region44: #{tpu_custom_call.1} parent=1 // pred_region
      %79 = dma.done [#allocation6], 512
    $region45: #{tpu_custom_call.1} parent=1 // pred_fallthru
      _
    // Predicated region
    $region46: #{tpu_custom_call.1} parent=1 // pred_check
      _
    $region47: #{tpu_custom_call.1} parent=1 // pred_check_branch
      %81 = sbr.rel (0) target = $region49
    $region48: #{tpu_custom_call.1} parent=1 // pred_region
      %82 = dma.done [#allocation9], 512
    $region49: #{tpu_custom_call.1} parent=1 // pred_fallthru
      _
    %v83 = vld [vmem:[#allocation5] sm:$0xff]
    %v84 = vld [vmem:[#allocation5 + $0x8] sm:$0xff]
    %v85 = vlaneseq
    %v86 = vshrl.u32 %v85, 7
    %v87 = vld [vmem:[#allocation2] sm:$0x1]
    %v88 = vlaneseq
    %v89 = vshrl.u32 %v88, 7
    %v90 = vsub.s32 0, %v89
    %v91 = vrot.slane %v87, %v90
    %vm92 = vcmp.eq.s32.totalorder %v86, %v91
    %v93 = vsel %vm92, 1, 0
    %v94 = vcvt.s32.f32 %v93
    %vm95 = vcmask 123904
    %v96 = vsel %vm95, %v94, 0.0
    %97 = vadd.xlane.f32.xlu0 %v96
    %v98 = vpop.xlane.xlu0 %97
    %v99 = vmax.f32 %v98, 1.0
    %v100 = vrcp.pop %v99
    %vm101 = vcmask 130048
    %v103 = vsel %vm101, %v94, 0
    %105 = vmatprep.subr.mxu0 0.0
    %106 = vmatpush1.msra.mxu0 %v83
    %107 = vmatprep.subr.mxu0 0.0
    %108 = vmatpush1.msra.mxu0 %v84
    %109 = vmatprep.subr.mxu0 0.0
    %110 = vmatpush1.msra.mxu0 0.0
    %111 = vmatprep.subr.mxu0 0.0
    %112 = vmatpush1.msra.mxu0 0.0
    %113 = vmatprep.subr.mxu0 0.0
    %114 = vmatpush1.msra.mxu0 0.0
    %115 = vmatprep.subr.mxu0 0.0
    %116 = vmatpush1.msra.mxu0 0.0
    %117 = vmatprep.subr.mxu0 0.0
    %118 = vmatpush1.msra.mxu0 0.0
    %119 = vmatprep.subr.mxu0 0.0
    %120 = vmatpush1.msra.mxu0 0.0
    %121 = vmatprep.subr.mxu0 0.0
    %122 = vmatpush1.msra.mxu0 0.0
    %123 = vmatprep.subr.mxu0 0.0
    %124 = vmatpush1.msra.mxu0 0.0
    %125 = vmatprep.subr.mxu0 0.0
    %126 = vmatpush1.msra.mxu0 0.0
    %127 = vmatprep.subr.mxu0 0.0
    %128 = vmatpush1.msra.mxu0 0.0
    %129 = vmatprep.subr.mxu0 0.0
    %130 = vmatpush1.msra.mxu0 0.0
    %131 = vmatprep.subr.mxu0 0.0
    %132 = vmatpush1.msra.mxu0 0.0
    %133 = vmatprep.subr.mxu0 0.0
    %134 = vmatpush1.msra.mxu0 0.0
    %135 = vmatprep.subr.mxu0 0.0
    %136 = vmatpush1.msra.mxu0 0.0
    %137 = vmatprep.subr.mxu0 0.0
    %138 = vmatpush1.msra.mxu0 0.0
    %139 = vmatprep.subr.mxu0 0.0
    %140 = vmatpush1.msra.mxu0 0.0
    %141 = vmatprep.subr.mxu0 0.0
    %142 = vmatpush1.msra.mxu0 0.0
    %143 = vmatprep.subr.mxu0 0.0
    %144 = vmatpush1.msra.mxu0 0.0
    %145 = vmatprep.subr.mxu0 0.0
    %146 = vmatpush1.msra.mxu0 0.0
    %147 = vmatprep.subr.mxu0 0.0
    %148 = vmatpush1.msra.mxu0 0.0
    %149 = vmatprep.subr.mxu0 0.0
    %150 = vmatpush1.msra.mxu0 0.0
    %151 = vmatprep.subr.mxu0 0.0
    %152 = vmatpush1.msra.mxu0 0.0
    %153 = vmatprep.subr.mxu0 0.0
    %154 = vmatpush1.msra.mxu0 0.0
    %155 = vmatprep.subr.mxu0 0.0
    %156 = vmatpush1.msra.mxu0 0.0
    %157 = vmatprep.subr.mxu0 0.0
    %158 = vmatpush1.msra.mxu0 0.0
    %159 = vmatprep.subr.mxu0 0.0
    %160 = vmatpush1.msra.mxu0 0.0
    %161 = vmatprep.subr.mxu0 0.0
    %162 = vmatpush1.msra.mxu0 0.0
    %163 = vmatprep.subr.mxu0 0.0
    %164 = vmatpush1.msra.mxu0 0.0
    %165 = vmatprep.subr.mxu0 0.0
    %166 = vmatpush1.msra.mxu0 0.0
    %167 = vmatprep.subr.mxu0 0.0
    %168 = vmatpush1.msra.mxu0 0.0
    %169 = vmatprep.mubr.f32.mxu0 0.0
    %170 = vmatmul.mubr.f32.gmra.mrb[0].mxu0 %v103
    %v171 = vpop.f32.mrb[0].mxu0
    %v172 = vadd.f32 0.0, %v171
    %v173 = vpop.f32.mrb[0].mxu0
    %174 = vdwg.mxu0
    %v175 = vmul.f32 %v172, %v100
    %v176 = vld [vmem:[%s4] sm:$0x1]
    %v177 = vld [vmem:[%s5] sm:$0x1]
    %v179 = vlaneseq
    %v180 = vshrl.u32 %v179, 7
    %v181 = vsub.s32 0, %v180
    %v182 = vrot.slane %v177, %v181
    %v184 = vld [vmem:[#allocation7] sm:$0xff]
    %v185 = vld [vmem:[#allocation7 + $0x8] sm:$0xff]
    %v186 = vld [vmem:[#allocation7 + $0x10] sm:$0xff]
    %v187 = vld [vmem:[#allocation7 + $0x18] sm:$0xff]
    %v188 = vld [vmem:[%s3] sm:$0x1]
    %v190 = vlaneseq
    %v191 = vshrl.u32 %v190, 7
    %v192 = vsub.s32 0, %v191
    %v193 = vrot.slane %v188, %v192
    %vm195 = vcmask 261120
    %v197 = vsel %vm195, %v175, 0
    %199 = vmatprep.subr.mxu0 0.0
    %200 = vmatpush1.msra.mxu0 %v184
    %201 = vmatprep.subr.mxu0 0.0
    %202 = vmatpush1.msra.mxu0 %v185
    %203 = vmatprep.subr.mxu0 0.0
    %204 = vmatpush1.msra.mxu0 %v186
    %205 = vmatprep.subr.mxu0 0.0
    %206 = vmatpush1.msra.mxu0 %v187
    %207 = vmatprep.subr.mxu0 0.0
    %208 = vmatpush1.msra.mxu0 0.0
    %209 = vmatprep.subr.mxu0 0.0
    %210 = vmatpush1.msra.mxu0 0.0
    %211 = vmatprep.subr.mxu0 0.0
    %212 = vmatpush1.msra.mxu0 0.0
    %213 = vmatprep.subr.mxu0 0.0
    %214 = vmatpush1.msra.mxu0 0.0
    %215 = vmatprep.subr.mxu0 0.0
    %216 = vmatpush1.msra.mxu0 0.0
    %217 = vmatprep.subr.mxu0 0.0
    %218 = vmatpush1.msra.mxu0 0.0
    %219 = vmatprep.subr.mxu0 0.0
    %220 = vmatpush1.msra.mxu0 0.0
    %221 = vmatprep.subr.mxu0 0.0
    %222 = vmatpush1.msra.mxu0 0.0
    %223 = vmatprep.subr.mxu0 0.0
    %224 = vmatpush1.msra.mxu0 0.0
    %225 = vmatprep.subr.mxu0 0.0
    %226 = vmatpush1.msra.mxu0 0.0
    %227 = vmatprep.subr.mxu0 0.0
    %228 = vmatpush1.msra.mxu0 0.0
    %229 = vmatprep.subr.mxu0 0.0
    %230 = vmatpush1.msra.mxu0 0.0
    %231 = vmatprep.subr.mxu0 0.0
    %232 = vmatpush1.msra.mxu0 0.0
    %233 = vmatprep.subr.mxu0 0.0
    %234 = vmatpush1.msra.mxu0 0.0
    %235 = vmatprep.subr.mxu0 0.0
    %236 = vmatpush1.msra.mxu0 0.0
    %237 = vmatprep.subr.mxu0 0.0
    %238 = vmatpush1.msra.mxu0 0.0
    %239 = vmatprep.subr.mxu0 0.0
    %240 = vmatpush1.msra.mxu0 0.0
    %241 = vmatprep.subr.mxu0 0.0
    %242 = vmatpush1.msra.mxu0 0.0
    %243 = vmatprep.subr.mxu0 0.0
    %244 = vmatpush1.msra.mxu0 0.0
    %245 = vmatprep.subr.mxu0 0.0
    %246 = vmatpush1.msra.mxu0 0.0
    %247 = vmatprep.subr.mxu0 0.0
    %248 = vmatpush1.msra.mxu0 0.0
    %249 = vmatprep.subr.mxu0 0.0
    %250 = vmatpush1.msra.mxu0 0.0
    %251 = vmatprep.subr.mxu0 0.0
    %252 = vmatpush1.msra.mxu0 0.0
    %253 = vmatprep.subr.mxu0 0.0
    %254 = vmatpush1.msra.mxu0 0.0
    %255 = vmatprep.subr.mxu0 0.0
    %256 = vmatpush1.msra.mxu0 0.0
    %257 = vmatprep.subr.mxu0 0.0
    %258 = vmatpush1.msra.mxu0 0.0
    %259 = vmatprep.subr.mxu0 0.0
    %260 = vmatpush1.msra.mxu0 0.0
    %261 = vmatprep.subr.mxu0 0.0
    %262 = vmatpush1.msra.mxu0 0.0
    %263 = vmatprep.mubr.f32.mxu0 0.0
    %264 = vmatmul.mubr.f32.gmra.mrb[0].mxu0 %v197
    %v265 = vpop.f32.mrb[0].mxu0
    %v266 = vadd.f32 %v193, %v265
    %v267 = vpop.f32.mrb[0].mxu0
    %268 = vdwg.mxu0
    %v270 = vlaneseq
    %v271 = vshrl.u32 %v270, 7
    %v272 = vsub.s32 0, %v271
    %v273 = vrot.slane %v176, %v272
    %v275 = vmul.f32 %v266, %v273
    %vm276 = vcmask 254976
    %v277 = vsel %vm276, %v275, 0.0
    %278 = vadd.xlane.f32.xlu0 %v277
    %v279 = vpop.xlane.xlu0 %278
    %v280 = vmul.f32 %v279, 0.17677669
    %vm281 = vcmask 1041408
    %v282 = vsel %vm281, %v280, -inf
    %v283 = vsub.f32 %v280, %v282
    %v284 = vmul.f32 %v283, 1.442695
    %v285 = vpow.pop %v284
    %vm286 = vcmask 74752
    %v287 = vsel %vm286, %v285, 0.0
    %288 = vadd.xlane.f32.xlu0 %v287
    %v289 = vpop.xlane.xlu0 %288
    %v290 = vrcp.pop %v289
    %v291 = vmul.f32 %v285, %v290
    %vm292 = vcmask 80896
    %v294 = vsel %vm292, %v291, 0
    %v296 = vsel %vm281, %v182, 0
    %298 = vmatprep.subr.mxu0 0.0
    %299 = vmatpush1.msra.mxu0 %v182
    %300 = vmatprep.subr.mxu0 0.0
    %301 = vmatpush1.msra.mxu0 %v296
    %302 = vmatprep.subr.mxu0 0.0
    %303 = vmatpush1.msra.mxu0 0.0
    %304 = vmatprep.subr.mxu0 0.0
    %305 = vmatpush1.msra.mxu0 0.0
    %306 = vmatprep.subr.mxu0 0.0
    %307 = vmatpush1.msra.mxu0 0.0
    %308 = vmatprep.subr.mxu0 0.0
    %309 = vmatpush1.msra.mxu0 0.0
    %310 = vmatprep.subr.mxu0 0.0
    %311 = vmatpush1.msra.mxu0 0.0
    %312 = vmatprep.subr.mxu0 0.0
    %313 = vmatpush1.msra.mxu0 0.0
    %314 = vmatprep.subr.mxu0 0.0
    %315 = vmatpush1.msra.mxu0 0.0
    %316 = vmatprep.subr.mxu0 0.0
    %317 = vmatpush1.msra.mxu0 0.0
    %318 = vmatprep.subr.mxu0 0.0
    %319 = vmatpush1.msra.mxu0 0.0
    %320 = vmatprep.subr.mxu0 0.0
    %321 = vmatpush1.msra.mxu0 0.0
    %322 = vmatprep.subr.mxu0 0.0
    %323 = vmatpush1.msra.mxu0 0.0
    %324 = vmatprep.subr.mxu0 0.0
    %325 = vmatpush1.msra.mxu0 0.0
    %326 = vmatprep.subr.mxu0 0.0
    %327 = vmatpush1.msra.mxu0 0.0
    %328 = vmatprep.subr.mxu0 0.0
    %329 = vmatpush1.msra.mxu0 0.0
    %330 = vmatprep.subr.mxu0 0.0
    %331 = vmatpush1.msra.mxu0 0.0
    %332 = vmatprep.subr.mxu0 0.0
    %333 = vmatpush1.msra.mxu0 0.0
    %334 = vmatprep.subr.mxu0 0.0
    %335 = vmatpush1.msra.mxu0 0.0
    %336 = vmatprep.subr.mxu0 0.0
    %337 = vmatpush1.msra.mxu0 0.0
    %338 = vmatprep.subr.mxu0 0.0
    %339 = vmatpush1.msra.mxu0 0.0
    %340 = vmatprep.subr.mxu0 0.0
    %341 = vmatpush1.msra.mxu0 0.0
    %342 = vmatprep.subr.mxu0 0.0
    %343 = vmatpush1.msra.mxu0 0.0
    %344 = vmatprep.subr.mxu0 0.0
    %345 = vmatpush1.msra.mxu0 0.0
    %346 = vmatprep.subr.mxu0 0.0
    %347 = vmatpush1.msra.mxu0 0.0
    %348 = vmatprep.subr.mxu0 0.0
    %349 = vmatpush1.msra.mxu0 0.0
    %350 = vmatprep.subr.mxu0 0.0
    %351 = vmatpush1.msra.mxu0 0.0
    %352 = vmatprep.subr.mxu0 0.0
    %353 = vmatpush1.msra.mxu0 0.0
    %354 = vmatprep.subr.mxu0 0.0
    %355 = vmatpush1.msra.mxu0 0.0
    %356 = vmatprep.subr.mxu0 0.0
    %357 = vmatpush1.msra.mxu0 0.0
    %358 = vmatprep.subr.mxu0 0.0
    %359 = vmatpush1.msra.mxu0 0.0
    %360 = vmatprep.subr.mxu0 0.0
    %361 = vmatpush1.msra.mxu0 0.0
    %362 = vmatprep.mubr.f32.mxu0 0.0
    %363 = vmatmul.mubr.f32.gmra.mrb[0].mxu0 %v294
    %v364 = vpop.f32.mrb[0].mxu0
    %v365 = vadd.f32 0.0, %v364
    %v366 = vpop.f32.mrb[0].mxu0
    %367 = vdwg.mxu0
    %v368 = vld [vmem:[#allocation8] sm:$0xff]
    %v369 = vld [vmem:[#allocation8 + $0x8] sm:$0xff]
    %v370 = vld [vmem:[#allocation8 + $0x10] sm:$0xff]
    %v371 = vld [vmem:[#allocation8 + $0x18] sm:$0xff]
    %v372 = vld [vmem:[%s7] sm:$0x1]
    %v374 = vlaneseq
    %v375 = vshrl.u32 %v374, 7
    %v376 = vsub.s32 0, %v375
    %v377 = vrot.slane %v372, %v376
    %v380 = vsel %vm195, %v365, 0
    %382 = vmatprep.subr.mxu0 0.0
    %383 = vmatpush1.msra.mxu0 %v368
    %384 = vmatprep.subr.mxu0 0.0
    %385 = vmatpush1.msra.mxu0 %v369
    %386 = vmatprep.subr.mxu0 0.0
    %387 = vmatpush1.msra.mxu0 %v370
    %388 = vmatprep.subr.mxu0 0.0
    %389 = vmatpush1.msra.mxu0 %v371
    %390 = vmatprep.subr.mxu0 0.0
    %391 = vmatpush1.msra.mxu0 0.0
    %392 = vmatprep.subr.mxu0 0.0
    %393 = vmatpush1.msra.mxu0 0.0
    %394 = vmatprep.subr.mxu0 0.0
    %395 = vmatpush1.msra.mxu0 0.0
    %396 = vmatprep.subr.mxu0 0.0
    %397 = vmatpush1.msra.mxu0 0.0
    %398 = vmatprep.subr.mxu0 0.0
    %399 = vmatpush1.msra.mxu0 0.0
    %400 = vmatprep.subr.mxu0 0.0
    %401 = vmatpush1.msra.mxu0 0.0
    %402 = vmatprep.subr.mxu0 0.0
    %403 = vmatpush1.msra.mxu0 0.0
    %404 = vmatprep.subr.mxu0 0.0
    %405 = vmatpush1.msra.mxu0 0.0
    %406 = vmatprep.subr.mxu0 0.0
    %407 = vmatpush1.msra.mxu0 0.0
    %408 = vmatprep.subr.mxu0 0.0
    %409 = vmatpush1.msra.mxu0 0.0
    %410 = vmatprep.subr.mxu0 0.0
    %411 = vmatpush1.msra.mxu0 0.0
    %412 = vmatprep.subr.mxu0 0.0
    %413 = vmatpush1.msra.mxu0 0.0
    %414 = vmatprep.subr.mxu0 0.0
    %415 = vmatpush1.msra.mxu0 0.0
    %416 = vmatprep.subr.mxu0 0.0
    %417 = vmatpush1.msra.mxu0 0.0
    %418 = vmatprep.subr.mxu0 0.0
    %419 = vmatpush1.msra.mxu0 0.0
    %420 = vmatprep.subr.mxu0 0.0
    %421 = vmatpush1.msra.mxu0 0.0
    %422 = vmatprep.subr.mxu0 0.0
    %423 = vmatpush1.msra.mxu0 0.0
    %424 = vmatprep.subr.mxu0 0.0
    %425 = vmatpush1.msra.mxu0 0.0
    %426 = vmatprep.subr.mxu0 0.0
    %427 = vmatpush1.msra.mxu0 0.0
    %428 = vmatprep.subr.mxu0 0.0
    %429 = vmatpush1.msra.mxu0 0.0
    %430 = vmatprep.subr.mxu0 0.0
    %431 = vmatpush1.msra.mxu0 0.0
    %432 = vmatprep.subr.mxu0 0.0
    %433 = vmatpush1.msra.mxu0 0.0
    %434 = vmatprep.subr.mxu0 0.0
    %435 = vmatpush1.msra.mxu0 0.0
    %436 = vmatprep.subr.mxu0 0.0
    %437 = vmatpush1.msra.mxu0 0.0
    %438 = vmatprep.subr.mxu0 0.0
    %439 = vmatpush1.msra.mxu0 0.0
    %440 = vmatprep.subr.mxu0 0.0
    %441 = vmatpush1.msra.mxu0 0.0
    %442 = vmatprep.subr.mxu0 0.0
    %443 = vmatpush1.msra.mxu0 0.0
    %444 = vmatprep.subr.mxu0 0.0
    %445 = vmatpush1.msra.mxu0 0.0
    %446 = vmatprep.mubr.f32.mxu0 0.0
    %447 = vmatmul.mubr.f32.gmra.mrb[0].mxu0 %v380
    %v448 = vpop.f32.mrb[0].mxu0
    %v449 = vadd.f32 %v377, %v448
    %v450 = vpop.f32.mrb[0].mxu0
    %451 = vdwg.mxu0
    %v452 = vadd.f32 %v449, 0.0
    %v453 = vadd.f32 %v452, 0.0
    %v455 = vsel %vm195, %v452, 0
    %457 = vmatprep.subr.mxu0 0.0
    %458 = vmatpush1.msra.mxu0 %v184
    %459 = vmatprep.subr.mxu0 0.0
    %460 = vmatpush1.msra.mxu0 %v185
    %461 = vmatprep.subr.mxu0 0.0
    %462 = vmatpush1.msra.mxu0 %v186
    %463 = vmatprep.subr.mxu0 0.0
    %464 = vmatpush1.msra.mxu0 %v187
    %465 = vmatprep.subr.mxu0 0.0
    %466 = vmatpush1.msra.mxu0 0.0
    %467 = vmatprep.subr.mxu0 0.0
    %468 = vmatpush1.msra.mxu0 0.0
    %469 = vmatprep.subr.mxu0 0.0
    %470 = vmatpush1.msra.mxu0 0.0
    %471 = vmatprep.subr.mxu0 0.0
    %472 = vmatpush1.msra.mxu0 0.0
    %473 = vmatprep.subr.mxu0 0.0
    %474 = vmatpush1.msra.mxu0 0.0
    %475 = vmatprep.subr.mxu0 0.0
    %476 = vmatpush1.msra.mxu0 0.0
    %477 = vmatprep.subr.mxu0 0.0
    %478 = vmatpush1.msra.mxu0 0.0
    %479 = vmatprep.subr.mxu0 0.0
    %480 = vmatpush1.msra.mxu0 0.0
    %481 = vmatprep.subr.mxu0 0.0
    %482 = vmatpush1.msra.mxu0 0.0
    %483 = vmatprep.subr.mxu0 0.0
    %484 = vmatpush1.msra.mxu0 0.0
    %485 = vmatprep.subr.mxu0 0.0
    %486 = vmatpush1.msra.mxu0 0.0
    %487 = vmatprep.subr.mxu0 0.0
    %488 = vmatpush1.msra.mxu0 0.0
    %489 = vmatprep.subr.mxu0 0.0
    %490 = vmatpush1.msra.mxu0 0.0
    %491 = vmatprep.subr.mxu0 0.0
    %492 = vmatpush1.msra.mxu0 0.0
    %493 = vmatprep.subr.mxu0 0.0
    %494 = vmatpush1.msra.mxu0 0.0
    %495 = vmatprep.subr.mxu0 0.0
    %496 = vmatpush1.msra.mxu0 0.0
    %497 = vmatprep.subr.mxu0 0.0
    %498 = vmatpush1.msra.mxu0 0.0
    %499 = vmatprep.subr.mxu0 0.0
    %500 = vmatpush1.msra.mxu0 0.0
    %501 = vmatprep.subr.mxu0 0.0
    %502 = vmatpush1.msra.mxu0 0.0
    %503 = vmatprep.subr.mxu0 0.0
    %504 = vmatpush1.msra.mxu0 0.0
    %505 = vmatprep.subr.mxu0 0.0
    %506 = vmatpush1.msra.mxu0 0.0
    %507 = vmatprep.subr.mxu0 0.0
    %508 = vmatpush1.msra.mxu0 0.0
    %509 = vmatprep.subr.mxu0 0.0
    %510 = vmatpush1.msra.mxu0 0.0
    %511 = vmatprep.subr.mxu0 0.0
    %512 = vmatpush1.msra.mxu0 0.0
    %513 = vmatprep.subr.mxu0 0.0
    %514 = vmatpush1.msra.mxu0 0.0
    %515 = vmatprep.subr.mxu0 0.0
    %516 = vmatpush1.msra.mxu0 0.0
    %517 = vmatprep.subr.mxu0 0.0
    %518 = vmatpush1.msra.mxu0 0.0
    %519 = vmatprep.subr.mxu0 0.0
    %520 = vmatpush1.msra.mxu0 0.0
    %521 = vmatprep.mubr.f32.mxu0 0.0
    %522 = vmatmul.mubr.f32.gmra.mrb[0].mxu0 %v455
    %v523 = vpop.f32.mrb[0].mxu0
    %v524 = vadd.f32 %v193, %v523
    %v525 = vpop.f32.mrb[0].mxu0
    %526 = vdwg.mxu0
    %v527 = vmul.f32 %v524, %v273
    %v528 = vsel %vm276, %v527, 0.0
    %529 = vadd.xlane.f32.xlu0 %v528
    %v530 = vpop.xlane.xlu0 %529
    %v531 = vmul.f32 %v530, 0.17677669
    %v532 = vsel %vm281, %v531, -inf
    %v533 = vsub.f32 %v531, %v532
    %v534 = vmul.f32 %v533, 1.442695
    %v535 = vpow.pop %v534
    %v536 = vsel %vm286, %v535, 0.0
    %537 = vadd.xlane.f32.xlu0 %v536
    %v538 = vpop.xlane.xlu0 %537
    %v539 = vrcp.pop %v538
    %v540 = vmul.f32 %v535, %v539
    %v542 = vsel %vm292, %v540, 0
    %544 = vmatprep.subr.mxu0 0.0
    %545 = vmatpush1.msra.mxu0 %v182
    %546 = vmatprep.subr.mxu0 0.0
    %547 = vmatpush1.msra.mxu0 %v296
    %548 = vmatprep.subr.mxu0 0.0
    %549 = vmatpush1.msra.mxu0 0.0
    %550 = vmatprep.subr.mxu0 0.0
    %551 = vmatpush1.msra.mxu0 0.0
    %552 = vmatprep.subr.mxu0 0.0
    %553 = vmatpush1.msra.mxu0 0.0
    %554 = vmatprep.subr.mxu0 0.0
    %555 = vmatpush1.msra.mxu0 0.0
    %556 = vmatprep.subr.mxu0 0.0
    %557 = vmatpush1.msra.mxu0 0.0
    %558 = vmatprep.subr.mxu0 0.0
    %559 = vmatpush1.msra.mxu0 0.0
    %560 = vmatprep.subr.mxu0 0.0
    %561 = vmatpush1.msra.mxu0 0.0
    %562 = vmatprep.subr.mxu0 0.0
    %563 = vmatpush1.msra.mxu0 0.0
    %564 = vmatprep.subr.mxu0 0.0
    %565 = vmatpush1.msra.mxu0 0.0
    %566 = vmatprep.subr.mxu0 0.0
    %567 = vmatpush1.msra.mxu0 0.0
    %568 = vmatprep.subr.mxu0 0.0
    %569 = vmatpush1.msra.mxu0 0.0
    %570 = vmatprep.subr.mxu0 0.0
    %571 = vmatpush1.msra.mxu0 0.0
    %572 = vmatprep.subr.mxu0 0.0
    %573 = vmatpush1.msra.mxu0 0.0
    %574 = vmatprep.subr.mxu0 0.0
    %575 = vmatpush1.msra.mxu0 0.0
    %576 = vmatprep.subr.mxu0 0.0
    %577 = vmatpush1.msra.mxu0 0.0
    %578 = vmatprep.subr.mxu0 0.0
    %579 = vmatpush1.msra.mxu0 0.0
    %580 = vmatprep.subr.mxu0 0.0
    %581 = vmatpush1.msra.mxu0 0.0
    %582 = vmatprep.subr.mxu0 0.0
    %583 = vmatpush1.msra.mxu0 0.0
    %584 = vmatprep.subr.mxu0 0.0
    %585 = vmatpush1.msra.mxu0 0.0
    %586 = vmatprep.subr.mxu0 0.0
    %587 = vmatpush1.msra.mxu0 0.0
    %588 = vmatprep.subr.mxu0 0.0
    %589 = vmatpush1.msra.mxu0 0.0
    %590 = vmatprep.subr.mxu0 0.0
    %591 = vmatpush1.msra.mxu0 0.0
    %592 = vmatprep.subr.mxu0 0.0
    %593 = vmatpush1.msra.mxu0 0.0
    %594 = vmatprep.subr.mxu0 0.0
    %595 = vmatpush1.msra.mxu0 0.0
    %596 = vmatprep.subr.mxu0 0.0
    %597 = vmatpush1.msra.mxu0 0.0
    %598 = vmatprep.subr.mxu0 0.0
    %599 = vmatpush1.msra.mxu0 0.0
    %600 = vmatprep.subr.mxu0 0.0
    %601 = vmatpush1.msra.mxu0 0.0
    %602 = vmatprep.subr.mxu0 0.0
    %603 = vmatpush1.msra.mxu0 0.0
    %604 = vmatprep.subr.mxu0 0.0
    %605 = vmatpush1.msra.mxu0 0.0
    %606 = vmatprep.subr.mxu0 0.0
    %607 = vmatpush1.msra.mxu0 0.0
    %608 = vmatprep.mubr.f32.mxu0 0.0
    %609 = vmatmul.mubr.f32.gmra.mrb[0].mxu0 %v542
    %v610 = vpop.f32.mrb[0].mxu0
    %v611 = vadd.f32 0.0, %v610
    %v612 = vpop.f32.mrb[0].mxu0
    %613 = vdwg.mxu0
    %v615 = vsel %vm195, %v611, 0
    %617 = vmatprep.subr.mxu0 0.0
    %618 = vmatpush1.msra.mxu0 %v368
    %619 = vmatprep.subr.mxu0 0.0
    %620 = vmatpush1.msra.mxu0 %v369
    %621 = vmatprep.subr.mxu0 0.0
    %622 = vmatpush1.msra.mxu0 %v370
    %623 = vmatprep.subr.mxu0 0.0
    %624 = vmatpush1.msra.mxu0 %v371
    %625 = vmatprep.subr.mxu0 0.0
    %626 = vmatpush1.msra.mxu0 0.0
    %627 = vmatprep.subr.mxu0 0.0
    %628 = vmatpush1.msra.mxu0 0.0
    %629 = vmatprep.subr.mxu0 0.0
    %630 = vmatpush1.msra.mxu0 0.0
    %631 = vmatprep.subr.mxu0 0.0
    %632 = vmatpush1.msra.mxu0 0.0
    %633 = vmatprep.subr.mxu0 0.0
    %634 = vmatpush1.msra.mxu0 0.0
    %635 = vmatprep.subr.mxu0 0.0
    %636 = vmatpush1.msra.mxu0 0.0
    %637 = vmatprep.subr.mxu0 0.0
    %638 = vmatpush1.msra.mxu0 0.0
    %639 = vmatprep.subr.mxu0 0.0
    %640 = vmatpush1.msra.mxu0 0.0
    %641 = vmatprep.subr.mxu0 0.0
    %642 = vmatpush1.msra.mxu0 0.0
    %643 = vmatprep.subr.mxu0 0.0
    %644 = vmatpush1.msra.mxu0 0.0
    %645 = vmatprep.subr.mxu0 0.0
    %646 = vmatpush1.msra.mxu0 0.0
    %647 = vmatprep.subr.mxu0 0.0
    %648 = vmatpush1.msra.mxu0 0.0
    %649 = vmatprep.subr.mxu0 0.0
    %650 = vmatpush1.msra.mxu0 0.0
    %651 = vmatprep.subr.mxu0 0.0
    %652 = vmatpush1.msra.mxu0 0.0
    %653 = vmatprep.subr.mxu0 0.0
    %654 = vmatpush1.msra.mxu0 0.0
    %655 = vmatprep.subr.mxu0 0.0
    %656 = vmatpush1.msra.mxu0 0.0
    %657 = vmatprep.subr.mxu0 0.0
    %658 = vmatpush1.msra.mxu0 0.0
    %659 = vmatprep.subr.mxu0 0.0
    %660 = vmatpush1.msra.mxu0 0.0
    %661 = vmatprep.subr.mxu0 0.0
    %662 = vmatpush1.msra.mxu0 0.0
    %663 = vmatprep.subr.mxu0 0.0
    %664 = vmatpush1.msra.mxu0 0.0
    %665 = vmatprep.subr.mxu0 0.0
    %666 = vmatpush1.msra.mxu0 0.0
    %667 = vmatprep.subr.mxu0 0.0
    %668 = vmatpush1.msra.mxu0 0.0
    %669 = vmatprep.subr.mxu0 0.0
    %670 = vmatpush1.msra.mxu0 0.0
    %671 = vmatprep.subr.mxu0 0.0
    %672 = vmatpush1.msra.mxu0 0.0
    %673 = vmatprep.subr.mxu0 0.0
    %674 = vmatpush1.msra.mxu0 0.0
    %675 = vmatprep.subr.mxu0 0.0
    %676 = vmatpush1.msra.mxu0 0.0
    %677 = vmatprep.subr.mxu0 0.0
    %678 = vmatpush1.msra.mxu0 0.0
    %679 = vmatprep.subr.mxu0 0.0
    %680 = vmatpush1.msra.mxu0 0.0
    %681 = vmatprep.mubr.f32.mxu0 0.0
    %682 = vmatmul.mubr.f32.gmra.mrb[0].mxu0 %v615
    %v683 = vpop.f32.mrb[0].mxu0
    %v684 = vadd.f32 %v377, %v683
    %v685 = vpop.f32.mrb[0].mxu0
    %686 = vdwg.mxu0
    %v687 = vadd.f32 %v453, %v684
    %v688 = vrcp.pop 2.0
    %v689 = vmul.f32 %v687, %v688
    %v690 = vadd.f32 %v453, %v689
    %v692 = vsel %vm195, %v689, 0
    %694 = vmatprep.subr.mxu0 0.0
    %695 = vmatpush1.msra.mxu0 %v184
    %696 = vmatprep.subr.mxu0 0.0
    %697 = vmatpush1.msra.mxu0 %v185
    %698 = vmatprep.subr.mxu0 0.0
    %699 = vmatpush1.msra.mxu0 %v186
    %700 = vmatprep.subr.mxu0 0.0
    %701 = vmatpush1.msra.mxu0 %v187
    %702 = vmatprep.subr.mxu0 0.0
    %703 = vmatpush1.msra.mxu0 0.0
    %704 = vmatprep.subr.mxu0 0.0
    %705 = vmatpush1.msra.mxu0 0.0
    %706 = vmatprep.subr.mxu0 0.0
    %707 = vmatpush1.msra.mxu0 0.0
    %708 = vmatprep.subr.mxu0 0.0
    %709 = vmatpush1.msra.mxu0 0.0
    %710 = vmatprep.subr.mxu0 0.0
    %711 = vmatpush1.msra.mxu0 0.0
    %712 = vmatprep.subr.mxu0 0.0
    %713 = vmatpush1.msra.mxu0 0.0
    %714 = vmatprep.subr.mxu0 0.0
    %715 = vmatpush1.msra.mxu0 0.0
    %716 = vmatprep.subr.mxu0 0.0
    %717 = vmatpush1.msra.mxu0 0.0
    %718 = vmatprep.subr.mxu0 0.0
    %719 = vmatpush1.msra.mxu0 0.0
    %720 = vmatprep.subr.mxu0 0.0
    %721 = vmatpush1.msra.mxu0 0.0
    %722 = vmatprep.subr.mxu0 0.0
    %723 = vmatpush1.msra.mxu0 0.0
    %724 = vmatprep.subr.mxu0 0.0
    %725 = vmatpush1.msra.mxu0 0.0
    %726 = vmatprep.subr.mxu0 0.0
    %727 = vmatpush1.msra.mxu0 0.0
    %728 = vmatprep.subr.mxu0 0.0
    %729 = vmatpush1.msra.mxu0 0.0
    %730 = vmatprep.subr.mxu0 0.0
    %731 = vmatpush1.msra.mxu0 0.0
    %732 = vmatprep.subr.mxu0 0.0
    %733 = vmatpush1.msra.mxu0 0.0
    %734 = vmatprep.subr.mxu0 0.0
    %735 = vmatpush1.msra.mxu0 0.0
    %736 = vmatprep.subr.mxu0 0.0
    %737 = vmatpush1.msra.mxu0 0.0
    %738 = vmatprep.subr.mxu0 0.0
    %739 = vmatpush1.msra.mxu0 0.0
    %740 = vmatprep.subr.mxu0 0.0
    %741 = vmatpush1.msra.mxu0 0.0
    %742 = vmatprep.subr.mxu0 0.0
    %743 = vmatpush1.msra.mxu0 0.0
    %744 = vmatprep.subr.mxu0 0.0
    %745 = vmatpush1.msra.mxu0 0.0
    %746 = vmatprep.subr.mxu0 0.0
    %747 = vmatpush1.msra.mxu0 0.0
    %748 = vmatprep.subr.mxu0 0.0
    %749 = vmatpush1.msra.mxu0 0.0
    %750 = vmatprep.subr.mxu0 0.0
    %751 = vmatpush1.msra.mxu0 0.0
    %752 = vmatprep.subr.mxu0 0.0
    %753 = vmatpush1.msra.mxu0 0.0
    %754 = vmatprep.subr.mxu0 0.0
    %755 = vmatpush1.msra.mxu0 0.0
    %756 = vmatprep.subr.mxu0 0.0
    %757 = vmatpush1.msra.mxu0 0.0
    %758 = vmatprep.mubr.f32.mxu0 0.0
    %759 = vmatmul.mubr.f32.gmra.mrb[0].mxu0 %v692
    %v760 = vpop.f32.mrb[0].mxu0
    %v761 = vadd.f32 %v193, %v760
    %v762 = vpop.f32.mrb[0].mxu0
    %763 = vdwg.mxu0
    %v764 = vmul.f32 %v761, %v273
    %v765 = vsel %vm276, %v764, 0.0
    %766 = vadd.xlane.f32.xlu0 %v765
    %v767 = vpop.xlane.xlu0 %766
    %v768 = vmul.f32 %v767, 0.17677669
    %v769 = vsel %vm281, %v768, -inf
    %v770 = vsub.f32 %v768, %v769
    %v771 = vmul.f32 %v770, 1.442695
    %v772 = vpow.pop %v771
    %v773 = vsel %vm286, %v772, 0.0
    %774 = vadd.xlane.f32.xlu0 %v773
    %v775 = vpop.xlane.xlu0 %774
    %v776 = vrcp.pop %v775
    %v777 = vmul.f32 %v772, %v776
    %v779 = vsel %vm292, %v777, 0
    %781 = vmatprep.subr.mxu0 0.0
    %782 = vmatpush1.msra.mxu0 %v182
    %783 = vmatprep.subr.mxu0 0.0
    %784 = vmatpush1.msra.mxu0 %v296
    %785 = vmatprep.subr.mxu0 0.0
    %786 = vmatpush1.msra.mxu0 0.0
    %787 = vmatprep.subr.mxu0 0.0
    %788 = vmatpush1.msra.mxu0 0.0
    %789 = vmatprep.subr.mxu0 0.0
    %790 = vmatpush1.msra.mxu0 0.0
    %791 = vmatprep.subr.mxu0 0.0
    %792 = vmatpush1.msra.mxu0 0.0
    %793 = vmatprep.subr.mxu0 0.0
    %794 = vmatpush1.msra.mxu0 0.0
    %795 = vmatprep.subr.mxu0 0.0
    %796 = vmatpush1.msra.mxu0 0.0
    %797 = vmatprep.subr.mxu0 0.0
    %798 = vmatpush1.msra.mxu0 0.0
    %799 = vmatprep.subr.mxu0 0.0
    %800 = vmatpush1.msra.mxu0 0.0
    %801 = vmatprep.subr.mxu0 0.0
    %802 = vmatpush1.msra.mxu0 0.0
    %803 = vmatprep.subr.mxu0 0.0
    %804 = vmatpush1.msra.mxu0 0.0
    %805 = vmatprep.subr.mxu0 0.0
    %806 = vmatpush1.msra.mxu0 0.0
    %807 = vmatprep.subr.mxu0 0.0
    %808 = vmatpush1.msra.mxu0 0.0
    %809 = vmatprep.subr.mxu0 0.0
    %810 = vmatpush1.msra.mxu0 0.0
    %811 = vmatprep.subr.mxu0 0.0
    %812 = vmatpush1.msra.mxu0 0.0
    %813 = vmatprep.subr.mxu0 0.0
    %814 = vmatpush1.msra.mxu0 0.0
    %815 = vmatprep.subr.mxu0 0.0
    %816 = vmatpush1.msra.mxu0 0.0
    %817 = vmatprep.subr.mxu0 0.0
    %818 = vmatpush1.msra.mxu0 0.0
    %819 = vmatprep.subr.mxu0 0.0
    %820 = vmatpush1.msra.mxu0 0.0
    %821 = vmatprep.subr.mxu0 0.0
    %822 = vmatpush1.msra.mxu0 0.0
    %823 = vmatprep.subr.mxu0 0.0
    %824 = vmatpush1.msra.mxu0 0.0
    %825 = vmatprep.subr.mxu0 0.0
    %826 = vmatpush1.msra.mxu0 0.0
    %827 = vmatprep.subr.mxu0 0.0
    %828 = vmatpush1.msra.mxu0 0.0
    %829 = vmatprep.subr.mxu0 0.0
    %830 = vmatpush1.msra.mxu0 0.0
    %831 = vmatprep.subr.mxu0 0.0
    %832 = vmatpush1.msra.mxu0 0.0
    %833 = vmatprep.subr.mxu0 0.0
    %834 = vmatpush1.msra.mxu0 0.0
    %835 = vmatprep.subr.mxu0 0.0
    %836 = vmatpush1.msra.mxu0 0.0
    %837 = vmatprep.subr.mxu0 0.0
    %838 = vmatpush1.msra.mxu0 0.0
    %839 = vmatprep.subr.mxu0 0.0
    %840 = vmatpush1.msra.mxu0 0.0
    %841 = vmatprep.subr.mxu0 0.0
    %842 = vmatpush1.msra.mxu0 0.0
    %843 = vmatprep.subr.mxu0 0.0
    %844 = vmatpush1.msra.mxu0 0.0
    %845 = vmatprep.mubr.f32.mxu0 0.0
    %846 = vmatmul.mubr.f32.gmra.mrb[0].mxu0 %v779
    %v847 = vpop.f32.mrb[0].mxu0
    %v848 = vadd.f32 0.0, %v847
    %v849 = vpop.f32.mrb[0].mxu0
    %850 = vdwg.mxu0
    %v852 = vsel %vm195, %v848, 0
    %854 = vmatprep.subr.mxu0 0.0
    %855 = vmatpush1.msra.mxu0 %v368
    %856 = vmatprep.subr.mxu0 0.0
    %857 = vmatpush1.msra.mxu0 %v369
    %858 = vmatprep.subr.mxu0 0.0
    %859 = vmatpush1.msra.mxu0 %v370
    %860 = vmatprep.subr.mxu0 0.0
    %861 = vmatpush1.msra.mxu0 %v371
    %862 = vmatprep.subr.mxu0 0.0
    %863 = vmatpush1.msra.mxu0 0.0
    %864 = vmatprep.subr.mxu0 0.0
    %865 = vmatpush1.msra.mxu0 0.0
    %866 = vmatprep.subr.mxu0 0.0
    %867 = vmatpush1.msra.mxu0 0.0
    %868 = vmatprep.subr.mxu0 0.0
    %869 = vmatpush1.msra.mxu0 0.0
    %870 = vmatprep.subr.mxu0 0.0
    %871 = vmatpush1.msra.mxu0 0.0
    %872 = vmatprep.subr.mxu0 0.0
    %873 = vmatpush1.msra.mxu0 0.0
    %874 = vmatprep.subr.mxu0 0.0
    %875 = vmatpush1.msra.mxu0 0.0
    %876 = vmatprep.subr.mxu0 0.0
    %877 = vmatpush1.msra.mxu0 0.0
    %878 = vmatprep.subr.mxu0 0.0
    %879 = vmatpush1.msra.mxu0 0.0
    %880 = vmatprep.subr.mxu0 0.0
    %881 = vmatpush1.msra.mxu0 0.0
    %882 = vmatprep.subr.mxu0 0.0
    %883 = vmatpush1.msra.mxu0 0.0
    %884 = vmatprep.subr.mxu0 0.0
    %885 = vmatpush1.msra.mxu0 0.0
    %886 = vmatprep.subr.mxu0 0.0
    %887 = vmatpush1.msra.mxu0 0.0
    %888 = vmatprep.subr.mxu0 0.0
    %889 = vmatpush1.msra.mxu0 0.0
    %890 = vmatprep.subr.mxu0 0.0
    %891 = vmatpush1.msra.mxu0 0.0
    %892 = vmatprep.subr.mxu0 0.0
    %893 = vmatpush1.msra.mxu0 0.0
    %894 = vmatprep.subr.mxu0 0.0
    %895 = vmatpush1.msra.mxu0 0.0
    %896 = vmatprep.subr.mxu0 0.0
    %897 = vmatpush1.msra.mxu0 0.0
    %898 = vmatprep.subr.mxu0 0.0
    %899 = vmatpush1.msra.mxu0 0.0
    %900 = vmatprep.subr.mxu0 0.0
    %901 = vmatpush1.msra.mxu0 0.0
    %902 = vmatprep.subr.mxu0 0.0
    %903 = vmatpush1.msra.mxu0 0.0
    %904 = vmatprep.subr.mxu0 0.0
    %905 = vmatpush1.msra.mxu0 0.0
    %906 = vmatprep.subr.mxu0 0.0
    %907 = vmatpush1.msra.mxu0 0.0
    %908 = vmatprep.subr.mxu0 0.0
    %909 = vmatpush1.msra.mxu0 0.0
    %910 = vmatprep.subr.mxu0 0.0
    %911 = vmatpush1.msra.mxu0 0.0
    %912 = vmatprep.subr.mxu0 0.0
    %913 = vmatpush1.msra.mxu0 0.0
    %914 = vmatprep.subr.mxu0 0.0
    %915 = vmatpush1.msra.mxu0 0.0
    %916 = vmatprep.subr.mxu0 0.0
    %917 = vmatpush1.msra.mxu0 0.0
    %918 = vmatprep.mubr.f32.mxu0 0.0
    %919 = vmatmul.mubr.f32.gmra.mrb[0].mxu0 %v852
    %v920 = vpop.f32.mrb[0].mxu0
    %v921 = vadd.f32 %v377, %v920
    %v922 = vpop.f32.mrb[0].mxu0
    %923 = vdwg.mxu0
    %v924 = vadd.f32 %v690, %v921
    %v925 = vrcp.pop 3.0
    %v926 = vmul.f32 %v924, %v925
    %v927 = vadd.f32 %v690, %v926
    %v929 = vsel %vm195, %v926, 0
    %931 = vmatprep.subr.mxu0 0.0
    %932 = vmatpush1.msra.mxu0 %v184
    %933 = vmatprep.subr.mxu0 0.0
    %934 = vmatpush1.msra.mxu0 %v185
    %935 = vmatprep.subr.mxu0 0.0
    %936 = vmatpush1.msra.mxu0 %v186
    %937 = vmatprep.subr.mxu0 0.0
    %938 = vmatpush1.msra.mxu0 %v187
    %939 = vmatprep.subr.mxu0 0.0
    %940 = vmatpush1.msra.mxu0 0.0
    %941 = vmatprep.subr.mxu0 0.0
    %942 = vmatpush1.msra.mxu0 0.0
    %943 = vmatprep.subr.mxu0 0.0
    %944 = vmatpush1.msra.mxu0 0.0
    %945 = vmatprep.subr.mxu0 0.0
    %946 = vmatpush1.msra.mxu0 0.0
    %947 = vmatprep.subr.mxu0 0.0
    %948 = vmatpush1.msra.mxu0 0.0
    %949 = vmatprep.subr.mxu0 0.0
    %950 = vmatpush1.msra.mxu0 0.0
    %951 = vmatprep.subr.mxu0 0.0
    %952 = vmatpush1.msra.mxu0 0.0
    %953 = vmatprep.subr.mxu0 0.0
    %954 = vmatpush1.msra.mxu0 0.0
    %955 = vmatprep.subr.mxu0 0.0
    %956 = vmatpush1.msra.mxu0 0.0
    %957 = vmatprep.subr.mxu0 0.0
    %958 = vmatpush1.msra.mxu0 0.0
    %959 = vmatprep.subr.mxu0 0.0
    %960 = vmatpush1.msra.mxu0 0.0
    %961 = vmatprep.subr.mxu0 0.0
    %962 = vmatpush1.msra.mxu0 0.0
    %963 = vmatprep.subr.mxu0 0.0
    %964 = vmatpush1.msra.mxu0 0.0
    %965 = vmatprep.subr.mxu0 0.0
    %966 = vmatpush1.msra.mxu0 0.0
    %967 = vmatprep.subr.mxu0 0.0
    %968 = vmatpush1.msra.mxu0 0.0
    %969 = vmatprep.subr.mxu0 0.0
    %970 = vmatpush1.msra.mxu0 0.0
    %971 = vmatprep.subr.mxu0 0.0
    %972 = vmatpush1.msra.mxu0 0.0
    %973 = vmatprep.subr.mxu0 0.0
    %974 = vmatpush1.msra.mxu0 0.0
    %975 = vmatprep.subr.mxu0 0.0
    %976 = vmatpush1.msra.mxu0 0.0
    %977 = vmatprep.subr.mxu0 0.0
    %978 = vmatpush1.msra.mxu0 0.0
    %979 = vmatprep.subr.mxu0 0.0
    %980 = vmatpush1.msra.mxu0 0.0
    %981 = vmatprep.subr.mxu0 0.0
    %982 = vmatpush1.msra.mxu0 0.0
    %983 = vmatprep.subr.mxu0 0.0
    %984 = vmatpush1.msra.mxu0 0.0
    %985 = vmatprep.subr.mxu0 0.0
    %986 = vmatpush1.msra.mxu0 0.0
    %987 = vmatprep.subr.mxu0 0.0
    %988 = vmatpush1.msra.mxu0 0.0
    %989 = vmatprep.subr.mxu0 0.0
    %990 = vmatpush1.msra.mxu0 0.0
    %991 = vmatprep.subr.mxu0 0.0
    %992 = vmatpush1.msra.mxu0 0.0
    %993 = vmatprep.subr.mxu0 0.0
    %994 = vmatpush1.msra.mxu0 0.0
    %995 = vmatprep.mubr.f32.mxu0 0.0
    %996 = vmatmul.mubr.f32.gmra.mrb[0].mxu0 %v929
    %v997 = vpop.f32.mrb[0].mxu0
    %v998 = vadd.f32 %v193, %v997
    %v999 = vpop.f32.mrb[0].mxu0
    %1000 = vdwg.mxu0
    %v1001 = vmul.f32 %v998, %v273
    %v1002 = vsel %vm276, %v1001, 0.0
    %1003 = vadd.xlane.f32.xlu0 %v1002
    %v1004 = vpop.xlane.xlu0 %1003
    %v1005 = vmul.f32 %v1004, 0.17677669
    %v1006 = vsel %vm281, %v1005, -inf
    %v1007 = vsub.f32 %v1005, %v1006
    %v1008 = vmul.f32 %v1007, 1.442695
    %v1009 = vpow.pop %v1008
    %v1010 = vsel %vm286, %v1009, 0.0
    %1011 = vadd.xlane.f32.xlu0 %v1010
    %v1012 = vpop.xlane.xlu0 %1011
    %v1013 = vrcp.pop %v1012
    %v1014 = vmul.f32 %v1009, %v1013
    %v1016 = vsel %vm292, %v1014, 0
    %1018 = vmatprep.subr.mxu0 0.0
    %1019 = vmatpush1.msra.mxu0 %v182
    %1020 = vmatprep.subr.mxu0 0.0
    %1021 = vmatpush1.msra.mxu0 %v296
    %1022 = vmatprep.subr.mxu0 0.0
    %1023 = vmatpush1.msra.mxu0 0.0
    %1024 = vmatprep.subr.mxu0 0.0
    %1025 = vmatpush1.msra.mxu0 0.0
    %1026 = vmatprep.subr.mxu0 0.0
    %1027 = vmatpush1.msra.mxu0 0.0
    %1028 = vmatprep.subr.mxu0 0.0
    %1029 = vmatpush1.msra.mxu0 0.0
    %1030 = vmatprep.subr.mxu0 0.0
    %1031 = vmatpush1.msra.mxu0 0.0
    %1032 = vmatprep.subr.mxu0 0.0
    %1033 = vmatpush1.msra.mxu0 0.0
    %1034 = vmatprep.subr.mxu0 0.0
    %1035 = vmatpush1.msra.mxu0 0.0
    %1036 = vmatprep.subr.mxu0 0.0
    %1037 = vmatpush1.msra.mxu0 0.0
    %1038 = vmatprep.subr.mxu0 0.0
    %1039 = vmatpush1.msra.mxu0 0.0
    %1040 = vmatprep.subr.mxu0 0.0
    %1041 = vmatpush1.msra.mxu0 0.0
    %1042 = vmatprep.subr.mxu0 0.0
    %1043 = vmatpush1.msra.mxu0 0.0
    %1044 = vmatprep.subr.mxu0 0.0
    %1045 = vmatpush1.msra.mxu0 0.0
    %1046 = vmatprep.subr.mxu0 0.0
    %1047 = vmatpush1.msra.mxu0 0.0
    %1048 = vmatprep.subr.mxu0 0.0
    %1049 = vmatpush1.msra.mxu0 0.0
    %1050 = vmatprep.subr.mxu0 0.0
    %1051 = vmatpush1.msra.mxu0 0.0
    %1052 = vmatprep.subr.mxu0 0.0
    %1053 = vmatpush1.msra.mxu0 0.0
    %1054 = vmatprep.subr.mxu0 0.0
    %1055 = vmatpush1.msra.mxu0 0.0
    %1056 = vmatprep.subr.mxu0 0.0
    %1057 = vmatpush1.msra.mxu0 0.0
    %1058 = vmatprep.subr.mxu0 0.0
    %1059 = vmatpush1.msra.mxu0 0.0
    %1060 = vmatprep.subr.mxu0 0.0
    %1061 = vmatpush1.msra.mxu0 0.0
    %1062 = vmatprep.subr.mxu0 0.0
    %1063 = vmatpush1.msra.mxu0 0.0
    %1064 = vmatprep.subr.mxu0 0.0
    %1065 = vmatpush1.msra.mxu0 0.0
    %1066 = vmatprep.subr.mxu0 0.0
    %1067 = vmatpush1.msra.mxu0 0.0
    %1068 = vmatprep.subr.mxu0 0.0
    %1069 = vmatpush1.msra.mxu0 0.0
    %1070 = vmatprep.subr.mxu0 0.0
    %1071 = vmatpush1.msra.mxu0 0.0
    %1072 = vmatprep.subr.mxu0 0.0
    %1073 = vmatpush1.msra.mxu0 0.0
    %1074 = vmatprep.subr.mxu0 0.0
    %1075 = vmatpush1.msra.mxu0 0.0
    %1076 = vmatprep.subr.mxu0 0.0
    %1077 = vmatpush1.msra.mxu0 0.0
    %1078 = vmatprep.subr.mxu0 0.0
    %1079 = vmatpush1.msra.mxu0 0.0
    %1080 = vmatprep.subr.mxu0 0.0
    %1081 = vmatpush1.msra.mxu0 0.0
    %1082 = vmatprep.mubr.f32.mxu0 0.0
    %1083 = vmatmul.mubr.f32.gmra.mrb[0].mxu0 %v1016
    %v1084 = vpop.f32.mrb[0].mxu0
    %v1085 = vadd.f32 0.0, %v1084
    %v1086 = vpop.f32.mrb[0].mxu0
    %1087 = vdwg.mxu0
    %v1089 = vsel %vm195, %v1085, 0
    %1091 = vmatprep.subr.mxu0 0.0
    %1092 = vmatpush1.msra.mxu0 %v368
    %1093 = vmatprep.subr.mxu0 0.0
    %1094 = vmatpush1.msra.mxu0 %v369
    %1095 = vmatprep.subr.mxu0 0.0
    %1096 = vmatpush1.msra.mxu0 %v370
    %1097 = vmatprep.subr.mxu0 0.0
    %1098 = vmatpush1.msra.mxu0 %v371
    %1099 = vmatprep.subr.mxu0 0.0
    %1100 = vmatpush1.msra.mxu0 0.0
    %1101 = vmatprep.subr.mxu0 0.0
    %1102 = vmatpush1.msra.mxu0 0.0
    %1103 = vmatprep.subr.mxu0 0.0
    %1104 = vmatpush1.msra.mxu0 0.0
    %1105 = vmatprep.subr.mxu0 0.0
    %1106 = vmatpush1.msra.mxu0 0.0
    %1107 = vmatprep.subr.mxu0 0.0
    %1108 = vmatpush1.msra.mxu0 0.0
    %1109 = vmatprep.subr.mxu0 0.0
    %1110 = vmatpush1.msra.mxu0 0.0
    %1111 = vmatprep.subr.mxu0 0.0
    %1112 = vmatpush1.msra.mxu0 0.0
    %1113 = vmatprep.subr.mxu0 0.0
    %1114 = vmatpush1.msra.mxu0 0.0
    %1115 = vmatprep.subr.mxu0 0.0
    %1116 = vmatpush1.msra.mxu0 0.0
    %1117 = vmatprep.subr.mxu0 0.0
    %1118 = vmatpush1.msra.mxu0 0.0
    %1119 = vmatprep.subr.mxu0 0.0
    %1120 = vmatpush1.msra.mxu0 0.0
    %1121 = vmatprep.subr.mxu0 0.0
    %1122 = vmatpush1.msra.mxu0 0.0
    %1123 = vmatprep.subr.mxu0 0.0
    %1124 = vmatpush1.msra.mxu0 0.0
    %1125 = vmatprep.subr.mxu0 0.0
    %1126 = vmatpush1.msra.mxu0 0.0
    %1127 = vmatprep.subr.mxu0 0.0
    %1128 = vmatpush1.msra.mxu0 0.0
    %1129 = vmatprep.subr.mxu0 0.0
    %1130 = vmatpush1.msra.mxu0 0.0
    %1131 = vmatprep.subr.mxu0 0.0
    %1132 = vmatpush1.msra.mxu0 0.0
    %1133 = vmatprep.subr.mxu0 0.0
    %1134 = vmatpush1.msra.mxu0 0.0
    %1135 = vmatprep.subr.mxu0 0.0
    %1136 = vmatpush1.msra.mxu0 0.0
    %1137 = vmatprep.subr.mxu0 0.0
    %1138 = vmatpush1.msra.mxu0 0.0
    %1139 = vmatprep.subr.mxu0 0.0
    %1140 = vmatpush1.msra.mxu0 0.0
    %1141 = vmatprep.subr.mxu0 0.0
    %1142 = vmatpush1.msra.mxu0 0.0
    %1143 = vmatprep.subr.mxu0 0.0
    %1144 = vmatpush1.msra.mxu0 0.0
    %1145 = vmatprep.subr.mxu0 0.0
    %1146 = vmatpush1.msra.mxu0 0.0
    %1147 = vmatprep.subr.mxu0 0.0
    %1148 = vmatpush1.msra.mxu0 0.0
    %1149 = vmatprep.subr.mxu0 0.0
    %1150 = vmatpush1.msra.mxu0 0.0
    %1151 = vmatprep.subr.mxu0 0.0
    %1152 = vmatpush1.msra.mxu0 0.0
    %1153 = vmatprep.subr.mxu0 0.0
    %1154 = vmatpush1.msra.mxu0 0.0
    %1155 = vmatprep.mubr.f32.mxu0 0.0
    %1156 = vmatmul.mubr.f32.gmra.mrb[0].mxu0 %v1089
    %v1157 = vpop.f32.mrb[0].mxu0
    %v1158 = vadd.f32 %v377, %v1157
    %v1159 = vpop.f32.mrb[0].mxu0
    %1160 = vdwg.mxu0
    %v1161 = vadd.f32 %v927, %v1158
    %v1162 = vrcp.pop 4.0
    %v1163 = vmul.f32 %v1161, %v1162
    %1164 = vrot.lane.b32.xlu0 %v689, 32
    %v1165 = vpop.permute.xlu0 %1164
    %1167 = vrot.lane.b32.xlu0 %v926, 64
    %v1168 = vpop.permute.xlu0 %1167
    %1171 = vrot.lane.b32.xlu0 %v1163, 96
    %v1172 = vpop.permute.xlu0 %1171
    %v1174 = vsel %vm195, %v452, %v1165
    %vm1175 = vcmask 523264
    %v1176 = vsel %vm1175, %v1174, %v1168
    %vm1177 = vcmask 785408
    %v1178 = vsel %vm1177, %v1176, %v1172
    %1179 = vst [vmem:[#allocation10] sm:$0x3] %v1178
    // Predicated region
    $region50: #{tpu_custom_call.1} parent=1 // pred_check
      _
    $region51: #{tpu_custom_call.1} parent=1 // pred_check_branch
      %1181 = sbr.rel (0) target = $region53
    $region52: #{tpu_custom_call.1} parent=1 // pred_region
      %s1183 = ssub.s32 32, 32
      %1184 = vsyncadd [#allocation4], %s1183
      %s1186 = sshll.u32 [#allocation10], 4
      %s1187 = int_to_ptr.vmem [resolvable:$true] %s1186
      %1189 = dma.vmem_to_hbm [thread:$0]  %s1187, 32, %s8, [#allocation4]
    $region53: #{tpu_custom_call.1} parent=1 // pred_fallthru
      _
    // Predicated region
    $region54: #{tpu_custom_call.1} parent=1 // pred_check
      _
    $region55: #{tpu_custom_call.1} parent=1 // pred_check_branch
      %1191 = sbr.rel (0) target = $region57
    $region56: #{tpu_custom_call.1} parent=1 // pred_region
      %1192 = dma.done [#allocation4], 32
    $region57: #{tpu_custom_call.1} parent=1 // pred_fallthru
      _
    %1193 = vsyncpa [#allocation3], 1
    %1194 = vsyncpa [#allocation6], 1
    %1195 = vsyncpa [#allocation9], 1
    %1196 = vsyncpa [#allocation4], 1

</llo_original>
